<compile_context>
chip_gen: v7x
topology: tpu7x:2x2x1
jax: 0.10.0
libtpu: 0.0.40
codegen_flags: <defaults>
</compile_context>

<pallas_src>
import jax
import jax.numpy as jnp
import numpy as np
from jax import lax
from jax.experimental import pallas as pl
from jax.experimental.pallas import tpu as pltpu

# -------------------- model configuration (small synthetic sizes) ------------
BIGNET_DIM = 128          # stand-in for the real BIGNET_DIM (lane-friendly)
LORA_DIM = 32
GROUP_SIZE = 16
N_BLOCKS = 6              # QLoRABigNet has 6 Blocks
N_LINEAR = 3 * N_BLOCKS   # 18 QLoRALinear layers total
N_LN = N_BLOCKS - 1       # 5 LayerNorms between blocks
EPS = 1e-5                # torch.nn.LayerNorm default
LORA_SCALE = 1.0 / 8.0


def _round_up(a, m):
    return ((a + m - 1) // m) * m


# ------------------------------ Pallas kernel --------------------------------
def bignet_kernel(x_ref, w_ref, b_ref, g_ref, beta_ref, o_ref):
    """Runs the full QLoRABigNet on one (TM, D) tile of rows.

    x_ref    : (TM, D) bf16 activations.
    w_ref    : (N_LINEAR, D, D) bf16, (in, out) layout, LoRA already folded in.
    b_ref    : (N_LINEAR, 1, D) f32 biases.
    g_ref    : (N_LN, 1, D) f32 LayerNorm gamma.
    beta_ref : (N_LN, 1, D) f32 LayerNorm beta.
    o_ref    : (TM, D) f32 output.
    """

    def linear(h, idx):
        # bf16 operands -> single MXU pass; accumulate in f32; bias add in f32.
        y = jnp.dot(h.astype(jnp.bfloat16), w_ref[idx],
                    preferred_element_type=jnp.float32)
        return y + b_ref[idx]

    def layernorm(h, idx):
        # Two-pass variance: robust to growing residual-stream mean across blocks.
        mu = jnp.mean(h, axis=-1, keepdims=True)
        d = h - mu
        var = jnp.mean(d * d, axis=-1, keepdims=True)
        return d * lax.rsqrt(var + EPS) * g_ref[idx] + beta_ref[idx]

    h = x_ref[...].astype(jnp.float32)
    # Fully unrolled: all layer indices static -> static slices, no dead LN / select.
    for blk in range(N_BLOCKS):
        if blk > 0:                               # LayerNorm sits *between* blocks
            h = layernorm(h, blk - 1)
        r = h
        h = jnp.maximum(linear(r, 3 * blk + 0), 0.0)
        h = jnp.maximum(linear(h, 3 * blk + 1), 0.0)
        h = linear(h, 3 * blk + 2)
        h = h + r                                 # residual of the Block
    o_ref[...] = h


def qlora_bignet(x, kernel_params, block_rows=None):
    wt, b, g, beta = kernel_params
    N, D = x.shape
    assert D == BIGNET_DIM

    # Row tile: 256 fills the 256-row MXUs on v6e/v7x (and just amortizes grid-step
    # overhead on v5e's 128x128 MXU).  Multiple of 16 so bf16 LHS sublanes pack fully.
    if block_rows is None:
        block_rows = 256
    n_rows = _round_up(max(N, 16), 16)
    tm = min(block_rows, n_rows)
    # v7x has 2 TensorCores sharing the "parallel" grid axis: if the whole (large) batch
    # fits one tile, split it so both cores get a >=128-row tile.
    if pl.cdiv(n_rows, tm) < 2 and n_rows >= 256:
        tm = _round_up(n_rows // 2, 16)
    n_pad = pl.cdiv(N, tm) * tm

    # Activations travel as bf16 (half the HBM<->VMEM traffic); math stays f32 in-kernel.
    x_bf16 = x.astype(jnp.bfloat16)
    if n_pad != N:
        x_bf16 = jnp.pad(x_bf16, ((0, n_pad - N), (0, 0)))

    # Grid-invariant parameters: one resident VMEM copy (no per-step re-DMA, no useless
    # double-buffering).
    resident = pl.BlockSpec(memory_space=pltpu.MemorySpace.VMEM)

    # Explicit scoped-VMEM budget: resident params + double-buffered in/out tiles + headroom.
    resident_bytes = (wt.size * wt.dtype.itemsize + b.size * b.dtype.itemsize
                      + g.size * g.dtype.itemsize + beta.size * beta.dtype.itemsize)
    tile_bytes = tm * D * 2 + tm * D * 4          # bf16 in tile + f32 out tile
    vmem_limit = min(int(resident_bytes + 4 * tile_bytes + (16 << 20)), 96 << 20)

    out = pl.pallas_call(
        bignet_kernel,
        out_shape=jax.ShapeDtypeStruct((n_pad, D), jnp.float32),
        grid=(n_pad // tm,),
        in_specs=[
            pl.BlockSpec((tm, D), lambda i: (i, 0)),   # activations (pipelined)
            resident,                                  # folded weights (bf16)
            resident,                                  # biases
            resident,                                  # LayerNorm gamma
            resident,                                  # LayerNorm beta
        ],
        out_specs=pl.BlockSpec((tm, D), lambda i: (i, 0)),
        compiler_params=pltpu.CompilerParams(
            dimension_semantics=("parallel",),
            vmem_limit_bytes=vmem_limit,
        ),
    )(x_bf16, wt, b, g, beta)
    return out[:N]


# --------------------------- parameter construction ---------------------------
def quant_dequant_4bit(w, group_size=GROUP_SIZE):
    """Mimics Linear4Bit block_quantize_4bit -> block_dequantize_4bit round trip."""
    out_f, in_f = w.shape
    flat = w.reshape(-1, group_size)
    norm = jnp.max(jnp.abs(flat), axis=-1, keepdims=True)
    norm = jnp.maximum(norm, 1e-8)                            # guard all-zero groups
    x_norm = (flat + norm) / (2.0 * norm)
    q = jnp.clip(jnp.round(x_norm * 15.0), 0.0, 15.0)        # 4-bit codes
    norm16 = norm.astype(jnp.float16).astype(jnp.float32)    # norm stored in fp16
    deq = (q / 15.0) * 2.0 * norm16 - norm16
    return deq.reshape(out_f, in_f)


def make_raw_params(key, dim=BIGNET_DIM, lora_dim=LORA_DIM):
    """Per-layer module parameters in PyTorch layout: W (out,in), bias (out,), A (lora,in), B (out,lora)."""
    ks = jax.random.split(key, 4 * N_LINEAR + 2 * N_LN)
    w_list, b_list, a_list, bm_list = [], [], [], []
    bound = 1.0 / np.sqrt(dim)                 # kaiming_uniform(a=sqrt(5)) bound
    k = 0
    for _ in range(N_LINEAR):
        w = jax.random.uniform(ks[k], (dim, dim), jnp.float32, -bound, bound); k += 1
        w_list.append(quant_dequant_4bit(w))                   # effective 4-bit base weight
        b_list.append(jax.random.uniform(ks[k], (dim,), jnp.float32, -bound, bound)); k += 1
        a_list.append(jax.random.uniform(ks[k], (lora_dim, dim), jnp.float32, -bound, bound)); k += 1
        # NOTE: the real module zero-inits lora_B; small random values here so the
        # (folded) LoRA path is actually exercised/verified.
        bm_list.append(jax.random.uniform(ks[k], (dim, lora_dim), jnp.float32, -0.05, 0.05)); k += 1
    g_list, beta_list = [], []
    for _ in range(N_LN):
        g_list.append(jax.random.uniform(ks[k], (dim,), jnp.float32, 0.5, 1.5)); k += 1
        beta_list.append(jax.random.uniform(ks[k], (dim,), jnp.float32, -0.5, 0.5)); k += 1
    return (jnp.stack(w_list), jnp.stack(b_list), jnp.stack(a_list),
            jnp.stack(bm_list), jnp.stack(g_list), jnp.stack(beta_list))


def prepare_kernel_params(raw_params):
    """Fold LoRA into the dequantized base weight, transpose to (in,out), cast to bf16.

    Intentional precision change vs. the module: (base + BA/8) is rounded once to bf16;
    the module applies LoRA in fp32 on top of the dequantized base.  Covered by the
    loose fp32 check below.
    """
    w, b, A, B, g, beta = raw_params
    w_eff = w + LORA_SCALE * jnp.matmul(B, A)                  # (L, out, in), f32
    wt = jnp.transpose(w_eff, (0, 2, 1)).astype(jnp.bfloat16)  # (L, in, out), bf16
    return (wt,
            b[:, None, :].astype(jnp.float32),                 # (L, 1, D)
            g[:, None, :].astype(jnp.float32),                 # (N_LN, 1, D)
            beta[:, None, :].astype(jnp.float32))              # (N_LN, 1, D)


# ------------------------------ pure-JAX references ---------------------------
def reference_forward_f32(x, raw_params):
    """Module-faithful fp32 reference: per-layer 4-bit base + separate LoRA path."""
    w, b, A, B, g, beta = raw_params
    h = x
    for blk in range(N_BLOCKS):
        r = h
        for j in range(3):
            i = 3 * blk + j
            base = h @ w[i].T + b[i]
            lora = (h @ A[i].T) @ B[i].T * LORA_SCALE
            h = base + lora
            if j < 2:
                h = jnp.maximum(h, 0.0)
        h = h + r
        if blk < N_BLOCKS - 1:
            mu = jnp.mean(h, axis=-1, keepdims=True)
            var = jnp.mean((h - mu) ** 2, axis=-1, keepdims=True)
            h = (h - mu) / jnp.sqrt(var + EPS) * g[blk] + beta[blk]
    return h


def reference_forward_matched(x, kernel_params):
    """Precision-matched reference: same folded bf16 weights + same math as the kernel."""
    wt, b, g, beta = kernel_params
    h = x.astype(jnp.bfloat16).astype(jnp.float32)
    for blk in range(N_BLOCKS):
        if blk > 0:
            mu = jnp.mean(h, axis=-1, keepdims=True)
            d = h - mu
            var = jnp.mean(d * d, axis=-1, keepdims=True)
            h = d * lax.rsqrt(var + EPS) * g[blk - 1] + beta[blk - 1]
        r = h
        for j in range(3):
            i = 3 * blk + j
            y = jnp.dot(h.astype(jnp.bfloat16), wt[i],
                        preferred_element_type=jnp.float32) + b[i]
            h = jnp.maximum(y, 0.0) if j < 2 else y
        h = h + r
    return h


# ------------------------------------ main ------------------------------------
if __name__ == "__main__":
    key = jax.random.PRNGKey(0)
    kx, kp = jax.random.split(key)
    N = 16
    x = jax.random.normal(kx, (N, BIGNET_DIM), dtype=jnp.float32)  # (batch, BIGNET_DIM)

    raw_params = make_raw_params(kp)
    kernel_params = prepare_kernel_params(raw_params)

    out = qlora_bignet(x, kernel_params)
    out = jax.block_until_ready(out)
    assert out.shape == (N, BIGNET_DIM) and out.dtype == jnp.float32

    # 1) Tight check vs. a reference that mirrors the kernel's precision choices
    #    (folded LoRA, bf16 matmul operands, f32 accumulation / epilogue).
    ref_matched = reference_forward_matched(x, kernel_params)
    np.testing.assert_allclose(np.asarray(out), np.asarray(ref_matched),
                               rtol=5e-4, atol=5e-4)

    # 2) Sanity check vs. the module-faithful fp32 reference (separate LoRA path,
    #    fp32 matmuls).  Loose tolerance bounds accumulated bf16 rounding across the
    #    18 layers while still catching structural bugs (transposes, bias, fold).
    ref_f32 = reference_forward_f32(x, raw_params)
    np.testing.assert_allclose(np.asarray(out), np.asarray(ref_f32),
                               rtol=1e-1, atol=1e-1)

    print("KERNEL_OK")
</pallas_src>

<mosaic_0001>
module attributes {stable_mosaic.version = 11 : i64} {
  func.func @bignet_kernel(%arg0: i32, %arg1: memref<16x128xbf16, #tpu.memory_space<vmem>>, %arg2: memref<18x128x128xbf16, #tpu.memory_space<vmem>>, %arg3: memref<18x1x128xf32, #tpu.memory_space<vmem>>, %arg4: memref<5x1x128xf32, #tpu.memory_space<vmem>>, %arg5: memref<5x1x128xf32, #tpu.memory_space<vmem>>, %arg6: memref<16x128xf32, #tpu.memory_space<vmem>>) attributes {dimension_semantics = [#tpu.dimension_semantics<parallel>], iteration_bounds = array<i64: 1>, scalar_prefetch = 0 : i64, scratch_operands = 0 : i64, tpu.core_type = #tpu.core_type<tc>, window_params = [{transform_indices = @transform_0, window_bounds = array<i64: 16, 128>}, {pipeline_mode = #tpu.pipeline_mode<synchronous>, transform_indices = @transform_1, window_bounds = array<i64: 18, 128, 128>}, {pipeline_mode = #tpu.pipeline_mode<synchronous>, transform_indices = @transform_2, window_bounds = array<i64: 18, 1, 128>}, {pipeline_mode = #tpu.pipeline_mode<synchronous>, transform_indices = @transform_3, window_bounds = array<i64: 5, 1, 128>}, {pipeline_mode = #tpu.pipeline_mode<synchronous>, transform_indices = @transform_4, window_bounds = array<i64: 5, 1, 128>}, {transform_indices = @transform_5, window_bounds = array<i64: 16, 128>}]} {
    %c0 = arith.constant 0 : index
    %c0_0 = arith.constant 0 : index
    %0 = vector.load %arg1[%c0, %c0_0] : memref<16x128xbf16, #tpu.memory_space<vmem>>, vector<16x128xbf16>
    %1 = arith.extf %0 : vector<16x128xbf16> to vector<16x128xf32>
    %2 = arith.truncf %1 : vector<16x128xf32> to vector<16x128xbf16>
    %c0_1 = arith.constant 0 : index
    %c0_2 = arith.constant 0 : index
    %c0_3 = arith.constant 0 : index
    %3 = vector.load %arg2[%c0_1, %c0_2, %c0_3] : memref<18x128x128xbf16, #tpu.memory_space<vmem>>, vector<1x128x128xbf16>
    %4 = vector.shape_cast %3 : vector<1x128x128xbf16> to vector<128x128xbf16>
    %cst = arith.constant dense<0.000000e+00> : vector<16x128xf32>
    %5 = tpu.matmul %2, %4, %cst {dimension_numbers = #tpu.dot_dimension_numbers<[1], [0], [0], [1], [0, 0, 1, 1], [], []>} : vector<16x128xbf16>, vector<128x128xbf16>, vector<16x128xf32> -> vector<16x128xf32>
    %c0_4 = arith.constant 0 : index
    %c0_5 = arith.constant 0 : index
    %c0_6 = arith.constant 0 : index
    %6 = vector.load %arg3[%c0_4, %c0_5, %c0_6] : memref<18x1x128xf32, #tpu.memory_space<vmem>>, vector<1x1x128xf32>
    %7 = vector.shape_cast %6 : vector<1x1x128xf32> to vector<1x128xf32>
    %8 = vector.broadcast %7 : vector<1x128xf32> to vector<16x128xf32>
    %9 = arith.addf %5, %8 : vector<16x128xf32>
    %cst_7 = arith.constant 0.000000e+00 : f32
    %10 = vector.broadcast %cst_7 : f32 to vector<16x128xf32>
    %11 = arith.maximumf %9, %10 : vector<16x128xf32>
    %12 = arith.truncf %11 : vector<16x128xf32> to vector<16x128xbf16>
    %c1 = arith.constant 1 : index
    %c0_8 = arith.constant 0 : index
    %c0_9 = arith.constant 0 : index
    %13 = vector.load %arg2[%c1, %c0_8, %c0_9] : memref<18x128x128xbf16, #tpu.memory_space<vmem>>, vector<1x128x128xbf16>
    %14 = vector.shape_cast %13 : vector<1x128x128xbf16> to vector<128x128xbf16>
    %cst_10 = arith.constant dense<0.000000e+00> : vector<16x128xf32>
    %15 = tpu.matmul %12, %14, %cst_10 {dimension_numbers = #tpu.dot_dimension_numbers<[1], [0], [0], [1], [0, 0, 1, 1], [], []>} : vector<16x128xbf16>, vector<128x128xbf16>, vector<16x128xf32> -> vector<16x128xf32>
    %c1_11 = arith.constant 1 : index
    %c0_12 = arith.constant 0 : index
    %c0_13 = arith.constant 0 : index
    %16 = vector.load %arg3[%c1_11, %c0_12, %c0_13] : memref<18x1x128xf32, #tpu.memory_space<vmem>>, vector<1x1x128xf32>
    %17 = vector.shape_cast %16 : vector<1x1x128xf32> to vector<1x128xf32>
    %18 = vector.broadcast %17 : vector<1x128xf32> to vector<16x128xf32>
    %19 = arith.addf %15, %18 : vector<16x128xf32>
    %cst_14 = arith.constant 0.000000e+00 : f32
    %20 = vector.broadcast %cst_14 : f32 to vector<16x128xf32>
    %21 = arith.maximumf %19, %20 : vector<16x128xf32>
    %22 = arith.truncf %21 : vector<16x128xf32> to vector<16x128xbf16>
    %c2 = arith.constant 2 : index
    %c0_15 = arith.constant 0 : index
    %c0_16 = arith.constant 0 : index
    %23 = vector.load %arg2[%c2, %c0_15, %c0_16] : memref<18x128x128xbf16, #tpu.memory_space<vmem>>, vector<1x128x128xbf16>
    %24 = vector.shape_cast %23 : vector<1x128x128xbf16> to vector<128x128xbf16>
    %cst_17 = arith.constant dense<0.000000e+00> : vector<16x128xf32>
    %25 = tpu.matmul %22, %24, %cst_17 {dimension_numbers = #tpu.dot_dimension_numbers<[1], [0], [0], [1], [0, 0, 1, 1], [], []>} : vector<16x128xbf16>, vector<128x128xbf16>, vector<16x128xf32> -> vector<16x128xf32>
    %c2_18 = arith.constant 2 : index
    %c0_19 = arith.constant 0 : index
    %c0_20 = arith.constant 0 : index
    %26 = vector.load %arg3[%c2_18, %c0_19, %c0_20] : memref<18x1x128xf32, #tpu.memory_space<vmem>>, vector<1x1x128xf32>
    %27 = vector.shape_cast %26 : vector<1x1x128xf32> to vector<1x128xf32>
    %28 = vector.broadcast %27 : vector<1x128xf32> to vector<16x128xf32>
    %29 = arith.addf %25, %28 : vector<16x128xf32>
    %30 = arith.addf %29, %1 : vector<16x128xf32>
    %cst_21 = arith.constant dense<0.000000e+00> : vector<16xf32>
    %31 = vector.multi_reduction <add>, %30, %cst_21 [1] : vector<16x128xf32> to vector<16xf32>
    %32 = vector.shape_cast %31 : vector<16xf32> to vector<16x1xf32>
    %cst_22 = arith.constant 1.280000e+02 : f32
    %33 = vector.broadcast %cst_22 : f32 to vector<16x1xf32>
    %34 = arith.divf %32, %33 : vector<16x1xf32>
    %35 = vector.broadcast %34 : vector<16x1xf32> to vector<16x128xf32>
    %36 = arith.subf %30, %35 : vector<16x128xf32>
    %37 = arith.mulf %36, %36 : vector<16x128xf32>
    %cst_23 = arith.constant dense<0.000000e+00> : vector<16xf32>
    %38 = vector.multi_reduction <add>, %37, %cst_23 [1] : vector<16x128xf32> to vector<16xf32>
    %39 = vector.shape_cast %38 : vector<16xf32> to vector<16x1xf32>
    %cst_24 = arith.constant 1.280000e+02 : f32
    %40 = vector.broadcast %cst_24 : f32 to vector<16x1xf32>
    %41 = arith.divf %39, %40 : vector<16x1xf32>
    %cst_25 = arith.constant 9.99999974E-6 : f32
    %42 = vector.broadcast %cst_25 : f32 to vector<16x1xf32>
    %43 = arith.addf %41, %42 : vector<16x1xf32>
    %44 = math.rsqrt %43 : vector<16x1xf32>
    %45 = vector.broadcast %44 : vector<16x1xf32> to vector<16x128xf32>
    %46 = arith.mulf %36, %45 : vector<16x128xf32>
    %c0_26 = arith.constant 0 : index
    %c0_27 = arith.constant 0 : index
    %c0_28 = arith.constant 0 : index
    %47 = vector.load %arg4[%c0_26, %c0_27, %c0_28] : memref<5x1x128xf32, #tpu.memory_space<vmem>>, vector<1x1x128xf32>
    %48 = vector.shape_cast %47 : vector<1x1x128xf32> to vector<1x128xf32>
    %49 = vector.broadcast %48 : vector<1x128xf32> to vector<16x128xf32>
    %50 = arith.mulf %46, %49 : vector<16x128xf32>
    %c0_29 = arith.constant 0 : index
    %c0_30 = arith.constant 0 : index
    %c0_31 = arith.constant 0 : index
    %51 = vector.load %arg5[%c0_29, %c0_30, %c0_31] : memref<5x1x128xf32, #tpu.memory_space<vmem>>, vector<1x1x128xf32>
    %52 = vector.shape_cast %51 : vector<1x1x128xf32> to vector<1x128xf32>
    %53 = vector.broadcast %52 : vector<1x128xf32> to vector<16x128xf32>
    %54 = arith.addf %50, %53 : vector<16x128xf32>
    %55 = arith.truncf %54 : vector<16x128xf32> to vector<16x128xbf16>
    %c3 = arith.constant 3 : index
    %c0_32 = arith.constant 0 : index
    %c0_33 = arith.constant 0 : index
    %56 = vector.load %arg2[%c3, %c0_32, %c0_33] : memref<18x128x128xbf16, #tpu.memory_space<vmem>>, vector<1x128x128xbf16>
    %57 = vector.shape_cast %56 : vector<1x128x128xbf16> to vector<128x128xbf16>
    %cst_34 = arith.constant dense<0.000000e+00> : vector<16x128xf32>
    %58 = tpu.matmul %55, %57, %cst_34 {dimension_numbers = #tpu.dot_dimension_numbers<[1], [0], [0], [1], [0, 0, 1, 1], [], []>} : vector<16x128xbf16>, vector<128x128xbf16>, vector<16x128xf32> -> vector<16x128xf32>
    %c3_35 = arith.constant 3 : index
    %c0_36 = arith.constant 0 : index
    %c0_37 = arith.constant 0 : index
    %59 = vector.load %arg3[%c3_35, %c0_36, %c0_37] : memref<18x1x128xf32, #tpu.memory_space<vmem>>, vector<1x1x128xf32>
    %60 = vector.shape_cast %59 : vector<1x1x128xf32> to vector<1x128xf32>
    %61 = vector.broadcast %60 : vector<1x128xf32> to vector<16x128xf32>
    %62 = arith.addf %58, %61 : vector<16x128xf32>
    %cst_38 = arith.constant 0.000000e+00 : f32
    %63 = vector.broadcast %cst_38 : f32 to vector<16x128xf32>
    %64 = arith.maximumf %62, %63 : vector<16x128xf32>
    %65 = arith.truncf %64 : vector<16x128xf32> to vector<16x128xbf16>
    %c4 = arith.constant 4 : index
    %c0_39 = arith.constant 0 : index
    %c0_40 = arith.constant 0 : index
    %66 = vector.load %arg2[%c4, %c0_39, %c0_40] : memref<18x128x128xbf16, #tpu.memory_space<vmem>>, vector<1x128x128xbf16>
    %67 = vector.shape_cast %66 : vector<1x128x128xbf16> to vector<128x128xbf16>
    %cst_41 = arith.constant dense<0.000000e+00> : vector<16x128xf32>
    %68 = tpu.matmul %65, %67, %cst_41 {dimension_numbers = #tpu.dot_dimension_numbers<[1], [0], [0], [1], [0, 0, 1, 1], [], []>} : vector<16x128xbf16>, vector<128x128xbf16>, vector<16x128xf32> -> vector<16x128xf32>
    %c4_42 = arith.constant 4 : index
    %c0_43 = arith.constant 0 : index
    %c0_44 = arith.constant 0 : index
    %69 = vector.load %arg3[%c4_42, %c0_43, %c0_44] : memref<18x1x128xf32, #tpu.memory_space<vmem>>, vector<1x1x128xf32>
    %70 = vector.shape_cast %69 : vector<1x1x128xf32> to vector<1x128xf32>
    %71 = vector.broadcast %70 : vector<1x128xf32> to vector<16x128xf32>
    %72 = arith.addf %68, %71 : vector<16x128xf32>
    %cst_45 = arith.constant 0.000000e+00 : f32
    %73 = vector.broadcast %cst_45 : f32 to vector<16x128xf32>
    %74 = arith.maximumf %72, %73 : vector<16x128xf32>
    %75 = arith.truncf %74 : vector<16x128xf32> to vector<16x128xbf16>
    %c5 = arith.constant 5 : index
    %c0_46 = arith.constant 0 : index
    %c0_47 = arith.constant 0 : index
    %76 = vector.load %arg2[%c5, %c0_46, %c0_47] : memref<18x128x128xbf16, #tpu.memory_space<vmem>>, vector<1x128x128xbf16>
    %77 = vector.shape_cast %76 : vector<1x128x128xbf16> to vector<128x128xbf16>
    %cst_48 = arith.constant dense<0.000000e+00> : vector<16x128xf32>
    %78 = tpu.matmul %75, %77, %cst_48 {dimension_numbers = #tpu.dot_dimension_numbers<[1], [0], [0], [1], [0, 0, 1, 1], [], []>} : vector<16x128xbf16>, vector<128x128xbf16>, vector<16x128xf32> -> vector<16x128xf32>
    %c5_49 = arith.constant 5 : index
    %c0_50 = arith.constant 0 : index
    %c0_51 = arith.constant 0 : index
    %79 = vector.load %arg3[%c5_49, %c0_50, %c0_51] : memref<18x1x128xf32, #tpu.memory_space<vmem>>, vector<1x1x128xf32>
    %80 = vector.shape_cast %79 : vector<1x1x128xf32> to vector<1x128xf32>
    %81 = vector.broadcast %80 : vector<1x128xf32> to vector<16x128xf32>
    %82 = arith.addf %78, %81 : vector<16x128xf32>
    %83 = arith.addf %82, %54 : vector<16x128xf32>
    %cst_52 = arith.constant dense<0.000000e+00> : vector<16xf32>
    %84 = vector.multi_reduction <add>, %83, %cst_52 [1] : vector<16x128xf32> to vector<16xf32>
    %85 = vector.shape_cast %84 : vector<16xf32> to vector<16x1xf32>
    %cst_53 = arith.constant 1.280000e+02 : f32
    %86 = vector.broadcast %cst_53 : f32 to vector<16x1xf32>
    %87 = arith.divf %85, %86 : vector<16x1xf32>
    %88 = vector.broadcast %87 : vector<16x1xf32> to vector<16x128xf32>
    %89 = arith.subf %83, %88 : vector<16x128xf32>
    %90 = arith.mulf %89, %89 : vector<16x128xf32>
    %cst_54 = arith.constant dense<0.000000e+00> : vector<16xf32>
    %91 = vector.multi_reduction <add>, %90, %cst_54 [1] : vector<16x128xf32> to vector<16xf32>
    %92 = vector.shape_cast %91 : vector<16xf32> to vector<16x1xf32>
    %cst_55 = arith.constant 1.280000e+02 : f32
    %93 = vector.broadcast %cst_55 : f32 to vector<16x1xf32>
    %94 = arith.divf %92, %93 : vector<16x1xf32>
    %cst_56 = arith.constant 9.99999974E-6 : f32
    %95 = vector.broadcast %cst_56 : f32 to vector<16x1xf32>
    %96 = arith.addf %94, %95 : vector<16x1xf32>
    %97 = math.rsqrt %96 : vector<16x1xf32>
    %98 = vector.broadcast %97 : vector<16x1xf32> to vector<16x128xf32>
    %99 = arith.mulf %89, %98 : vector<16x128xf32>
    %c1_57 = arith.constant 1 : index
    %c0_58 = arith.constant 0 : index
    %c0_59 = arith.constant 0 : index
    %100 = vector.load %arg4[%c1_57, %c0_58, %c0_59] : memref<5x1x128xf32, #tpu.memory_space<vmem>>, vector<1x1x128xf32>
    %101 = vector.shape_cast %100 : vector<1x1x128xf32> to vector<1x128xf32>
    %102 = vector.broadcast %101 : vector<1x128xf32> to vector<16x128xf32>
    %103 = arith.mulf %99, %102 : vector<16x128xf32>
    %c1_60 = arith.constant 1 : index
    %c0_61 = arith.constant 0 : index
    %c0_62 = arith.constant 0 : index
    %104 = vector.load %arg5[%c1_60, %c0_61, %c0_62] : memref<5x1x128xf32, #tpu.memory_space<vmem>>, vector<1x1x128xf32>
    %105 = vector.shape_cast %104 : vector<1x1x128xf32> to vector<1x128xf32>
    %106 = vector.broadcast %105 : vector<1x128xf32> to vector<16x128xf32>
    %107 = arith.addf %103, %106 : vector<16x128xf32>
    %108 = arith.truncf %107 : vector<16x128xf32> to vector<16x128xbf16>
    %c6 = arith.constant 6 : index
    %c0_63 = arith.constant 0 : index
    %c0_64 = arith.constant 0 : index
    %109 = vector.load %arg2[%c6, %c0_63, %c0_64] : memref<18x128x128xbf16, #tpu.memory_space<vmem>>, vector<1x128x128xbf16>
    %110 = vector.shape_cast %109 : vector<1x128x128xbf16> to vector<128x128xbf16>
    %cst_65 = arith.constant dense<0.000000e+00> : vector<16x128xf32>
    %111 = tpu.matmul %108, %110, %cst_65 {dimension_numbers = #tpu.dot_dimension_numbers<[1], [0], [0], [1], [0, 0, 1, 1], [], []>} : vector<16x128xbf16>, vector<128x128xbf16>, vector<16x128xf32> -> vector<16x128xf32>
    %c6_66 = arith.constant 6 : index
    %c0_67 = arith.constant 0 : index
    %c0_68 = arith.constant 0 : index
    %112 = vector.load %arg3[%c6_66, %c0_67, %c0_68] : memref<18x1x128xf32, #tpu.memory_space<vmem>>, vector<1x1x128xf32>
    %113 = vector.shape_cast %112 : vector<1x1x128xf32> to vector<1x128xf32>
    %114 = vector.broadcast %113 : vector<1x128xf32> to vector<16x128xf32>
    %115 = arith.addf %111, %114 : vector<16x128xf32>
    %cst_69 = arith.constant 0.000000e+00 : f32
    %116 = vector.broadcast %cst_69 : f32 to vector<16x128xf32>
    %117 = arith.maximumf %115, %116 : vector<16x128xf32>
    %118 = arith.truncf %117 : vector<16x128xf32> to vector<16x128xbf16>
    %c7 = arith.constant 7 : index
    %c0_70 = arith.constant 0 : index
    %c0_71 = arith.constant 0 : index
    %119 = vector.load %arg2[%c7, %c0_70, %c0_71] : memref<18x128x128xbf16, #tpu.memory_space<vmem>>, vector<1x128x128xbf16>
    %120 = vector.shape_cast %119 : vector<1x128x128xbf16> to vector<128x128xbf16>
    %cst_72 = arith.constant dense<0.000000e+00> : vector<16x128xf32>
    %121 = tpu.matmul %118, %120, %cst_72 {dimension_numbers = #tpu.dot_dimension_numbers<[1], [0], [0], [1], [0, 0, 1, 1], [], []>} : vector<16x128xbf16>, vector<128x128xbf16>, vector<16x128xf32> -> vector<16x128xf32>
    %c7_73 = arith.constant 7 : index
    %c0_74 = arith.constant 0 : index
    %c0_75 = arith.constant 0 : index
    %122 = vector.load %arg3[%c7_73, %c0_74, %c0_75] : memref<18x1x128xf32, #tpu.memory_space<vmem>>, vector<1x1x128xf32>
    %123 = vector.shape_cast %122 : vector<1x1x128xf32> to vector<1x128xf32>
    %124 = vector.broadcast %123 : vector<1x128xf32> to vector<16x128xf32>
    %125 = arith.addf %121, %124 : vector<16x128xf32>
    %cst_76 = arith.constant 0.000000e+00 : f32
    %126 = vector.broadcast %cst_76 : f32 to vector<16x128xf32>
    %127 = arith.maximumf %125, %126 : vector<16x128xf32>
    %128 = arith.truncf %127 : vector<16x128xf32> to vector<16x128xbf16>
    %c8 = arith.constant 8 : index
    %c0_77 = arith.constant 0 : index
    %c0_78 = arith.constant 0 : index
    %129 = vector.load %arg2[%c8, %c0_77, %c0_78] : memref<18x128x128xbf16, #tpu.memory_space<vmem>>, vector<1x128x128xbf16>
    %130 = vector.shape_cast %129 : vector<1x128x128xbf16> to vector<128x128xbf16>
    %cst_79 = arith.constant dense<0.000000e+00> : vector<16x128xf32>
    %131 = tpu.matmul %128, %130, %cst_79 {dimension_numbers = #tpu.dot_dimension_numbers<[1], [0], [0], [1], [0, 0, 1, 1], [], []>} : vector<16x128xbf16>, vector<128x128xbf16>, vector<16x128xf32> -> vector<16x128xf32>
    %c8_80 = arith.constant 8 : index
    %c0_81 = arith.constant 0 : index
    %c0_82 = arith.constant 0 : index
    %132 = vector.load %arg3[%c8_80, %c0_81, %c0_82] : memref<18x1x128xf32, #tpu.memory_space<vmem>>, vector<1x1x128xf32>
    %133 = vector.shape_cast %132 : vector<1x1x128xf32> to vector<1x128xf32>
    %134 = vector.broadcast %133 : vector<1x128xf32> to vector<16x128xf32>
    %135 = arith.addf %131, %134 : vector<16x128xf32>
    %136 = arith.addf %135, %107 : vector<16x128xf32>
    %cst_83 = arith.constant dense<0.000000e+00> : vector<16xf32>
    %137 = vector.multi_reduction <add>, %136, %cst_83 [1] : vector<16x128xf32> to vector<16xf32>
    %138 = vector.shape_cast %137 : vector<16xf32> to vector<16x1xf32>
    %cst_84 = arith.constant 1.280000e+02 : f32
    %139 = vector.broadcast %cst_84 : f32 to vector<16x1xf32>
    %140 = arith.divf %138, %139 : vector<16x1xf32>
    %141 = vector.broadcast %140 : vector<16x1xf32> to vector<16x128xf32>
    %142 = arith.subf %136, %141 : vector<16x128xf32>
    %143 = arith.mulf %142, %142 : vector<16x128xf32>
    %cst_85 = arith.constant dense<0.000000e+00> : vector<16xf32>
    %144 = vector.multi_reduction <add>, %143, %cst_85 [1] : vector<16x128xf32> to vector<16xf32>
    %145 = vector.shape_cast %144 : vector<16xf32> to vector<16x1xf32>
    %cst_86 = arith.constant 1.280000e+02 : f32
    %146 = vector.broadcast %cst_86 : f32 to vector<16x1xf32>
    %147 = arith.divf %145, %146 : vector<16x1xf32>
    %cst_87 = arith.constant 9.99999974E-6 : f32
    %148 = vector.broadcast %cst_87 : f32 to vector<16x1xf32>
    %149 = arith.addf %147, %148 : vector<16x1xf32>
    %150 = math.rsqrt %149 : vector<16x1xf32>
    %151 = vector.broadcast %150 : vector<16x1xf32> to vector<16x128xf32>
    %152 = arith.mulf %142, %151 : vector<16x128xf32>
    %c2_88 = arith.constant 2 : index
    %c0_89 = arith.constant 0 : index
    %c0_90 = arith.constant 0 : index
    %153 = vector.load %arg4[%c2_88, %c0_89, %c0_90] : memref<5x1x128xf32, #tpu.memory_space<vmem>>, vector<1x1x128xf32>
    %154 = vector.shape_cast %153 : vector<1x1x128xf32> to vector<1x128xf32>
    %155 = vector.broadcast %154 : vector<1x128xf32> to vector<16x128xf32>
    %156 = arith.mulf %152, %155 : vector<16x128xf32>
    %c2_91 = arith.constant 2 : index
    %c0_92 = arith.constant 0 : index
    %c0_93 = arith.constant 0 : index
    %157 = vector.load %arg5[%c2_91, %c0_92, %c0_93] : memref<5x1x128xf32, #tpu.memory_space<vmem>>, vector<1x1x128xf32>
    %158 = vector.shape_cast %157 : vector<1x1x128xf32> to vector<1x128xf32>
    %159 = vector.broadcast %158 : vector<1x128xf32> to vector<16x128xf32>
    %160 = arith.addf %156, %159 : vector<16x128xf32>
    %161 = arith.truncf %160 : vector<16x128xf32> to vector<16x128xbf16>
    %c9 = arith.constant 9 : index
    %c0_94 = arith.constant 0 : index
    %c0_95 = arith.constant 0 : index
    %162 = vector.load %arg2[%c9, %c0_94, %c0_95] : memref<18x128x128xbf16, #tpu.memory_space<vmem>>, vector<1x128x128xbf16>
    %163 = vector.shape_cast %162 : vector<1x128x128xbf16> to vector<128x128xbf16>
    %cst_96 = arith.constant dense<0.000000e+00> : vector<16x128xf32>
    %164 = tpu.matmul %161, %163, %cst_96 {dimension_numbers = #tpu.dot_dimension_numbers<[1], [0], [0], [1], [0, 0, 1, 1], [], []>} : vector<16x128xbf16>, vector<128x128xbf16>, vector<16x128xf32> -> vector<16x128xf32>
    %c9_97 = arith.constant 9 : index
    %c0_98 = arith.constant 0 : index
    %c0_99 = arith.constant 0 : index
    %165 = vector.load %arg3[%c9_97, %c0_98, %c0_99] : memref<18x1x128xf32, #tpu.memory_space<vmem>>, vector<1x1x128xf32>
    %166 = vector.shape_cast %165 : vector<1x1x128xf32> to vector<1x128xf32>
    %167 = vector.broadcast %166 : vector<1x128xf32> to vector<16x128xf32>
    %168 = arith.addf %164, %167 : vector<16x128xf32>
    %cst_100 = arith.constant 0.000000e+00 : f32
    %169 = vector.broadcast %cst_100 : f32 to vector<16x128xf32>
    %170 = arith.maximumf %168, %169 : vector<16x128xf32>
    %171 = arith.truncf %170 : vector<16x128xf32> to vector<16x128xbf16>
    %c10 = arith.constant 10 : index
    %c0_101 = arith.constant 0 : index
    %c0_102 = arith.constant 0 : index
    %172 = vector.load %arg2[%c10, %c0_101, %c0_102] : memref<18x128x128xbf16, #tpu.memory_space<vmem>>, vector<1x128x128xbf16>
    %173 = vector.shape_cast %172 : vector<1x128x128xbf16> to vector<128x128xbf16>
    %cst_103 = arith.constant dense<0.000000e+00> : vector<16x128xf32>
    %174 = tpu.matmul %171, %173, %cst_103 {dimension_numbers = #tpu.dot_dimension_numbers<[1], [0], [0], [1], [0, 0, 1, 1], [], []>} : vector<16x128xbf16>, vector<128x128xbf16>, vector<16x128xf32> -> vector<16x128xf32>
    %c10_104 = arith.constant 10 : index
    %c0_105 = arith.constant 0 : index
    %c0_106 = arith.constant 0 : index
    %175 = vector.load %arg3[%c10_104, %c0_105, %c0_106] : memref<18x1x128xf32, #tpu.memory_space<vmem>>, vector<1x1x128xf32>
    %176 = vector.shape_cast %175 : vector<1x1x128xf32> to vector<1x128xf32>
    %177 = vector.broadcast %176 : vector<1x128xf32> to vector<16x128xf32>
    %178 = arith.addf %174, %177 : vector<16x128xf32>
    %cst_107 = arith.constant 0.000000e+00 : f32
    %179 = vector.broadcast %cst_107 : f32 to vector<16x128xf32>
    %180 = arith.maximumf %178, %179 : vector<16x128xf32>
    %181 = arith.truncf %180 : vector<16x128xf32> to vector<16x128xbf16>
    %c11 = arith.constant 11 : index
    %c0_108 = arith.constant 0 : index
    %c0_109 = arith.constant 0 : index
    %182 = vector.load %arg2[%c11, %c0_108, %c0_109] : memref<18x128x128xbf16, #tpu.memory_space<vmem>>, vector<1x128x128xbf16>
    %183 = vector.shape_cast %182 : vector<1x128x128xbf16> to vector<128x128xbf16>
    %cst_110 = arith.constant dense<0.000000e+00> : vector<16x128xf32>
    %184 = tpu.matmul %181, %183, %cst_110 {dimension_numbers = #tpu.dot_dimension_numbers<[1], [0], [0], [1], [0, 0, 1, 1], [], []>} : vector<16x128xbf16>, vector<128x128xbf16>, vector<16x128xf32> -> vector<16x128xf32>
    %c11_111 = arith.constant 11 : index
    %c0_112 = arith.constant 0 : index
    %c0_113 = arith.constant 0 : index
    %185 = vector.load %arg3[%c11_111, %c0_112, %c0_113] : memref<18x1x128xf32, #tpu.memory_space<vmem>>, vector<1x1x128xf32>
    %186 = vector.shape_cast %185 : vector<1x1x128xf32> to vector<1x128xf32>
    %187 = vector.broadcast %186 : vector<1x128xf32> to vector<16x128xf32>
    %188 = arith.addf %184, %187 : vector<16x128xf32>
    %189 = arith.addf %188, %160 : vector<16x128xf32>
    %cst_114 = arith.constant dense<0.000000e+00> : vector<16xf32>
    %190 = vector.multi_reduction <add>, %189, %cst_114 [1] : vector<16x128xf32> to vector<16xf32>
    %191 = vector.shape_cast %190 : vector<16xf32> to vector<16x1xf32>
    %cst_115 = arith.constant 1.280000e+02 : f32
    %192 = vector.broadcast %cst_115 : f32 to vector<16x1xf32>
    %193 = arith.divf %191, %192 : vector<16x1xf32>
    %194 = vector.broadcast %193 : vector<16x1xf32> to vector<16x128xf32>
    %195 = arith.subf %189, %194 : vector<16x128xf32>
    %196 = arith.mulf %195, %195 : vector<16x128xf32>
    %cst_116 = arith.constant dense<0.000000e+00> : vector<16xf32>
    %197 = vector.multi_reduction <add>, %196, %cst_116 [1] : vector<16x128xf32> to vector<16xf32>
    %198 = vector.shape_cast %197 : vector<16xf32> to vector<16x1xf32>
    %cst_117 = arith.constant 1.280000e+02 : f32
    %199 = vector.broadcast %cst_117 : f32 to vector<16x1xf32>
    %200 = arith.divf %198, %199 : vector<16x1xf32>
    %cst_118 = arith.constant 9.99999974E-6 : f32
    %201 = vector.broadcast %cst_118 : f32 to vector<16x1xf32>
    %202 = arith.addf %200, %201 : vector<16x1xf32>
    %203 = math.rsqrt %202 : vector<16x1xf32>
    %204 = vector.broadcast %203 : vector<16x1xf32> to vector<16x128xf32>
    %205 = arith.mulf %195, %204 : vector<16x128xf32>
    %c3_119 = arith.constant 3 : index
    %c0_120 = arith.constant 0 : index
    %c0_121 = arith.constant 0 : index
    %206 = vector.load %arg4[%c3_119, %c0_120, %c0_121] : memref<5x1x128xf32, #tpu.memory_space<vmem>>, vector<1x1x128xf32>
    %207 = vector.shape_cast %206 : vector<1x1x128xf32> to vector<1x128xf32>
    %208 = vector.broadcast %207 : vector<1x128xf32> to vector<16x128xf32>
    %209 = arith.mulf %205, %208 : vector<16x128xf32>
    %c3_122 = arith.constant 3 : index
    %c0_123 = arith.constant 0 : index
    %c0_124 = arith.constant 0 : index
    %210 = vector.load %arg5[%c3_122, %c0_123, %c0_124] : memref<5x1x128xf32, #tpu.memory_space<vmem>>, vector<1x1x128xf32>
    %211 = vector.shape_cast %210 : vector<1x1x128xf32> to vector<1x128xf32>
    %212 = vector.broadcast %211 : vector<1x128xf32> to vector<16x128xf32>
    %213 = arith.addf %209, %212 : vector<16x128xf32>
    %214 = arith.truncf %213 : vector<16x128xf32> to vector<16x128xbf16>
    %c12 = arith.constant 12 : index
    %c0_125 = arith.constant 0 : index
    %c0_126 = arith.constant 0 : index
    %215 = vector.load %arg2[%c12, %c0_125, %c0_126] : memref<18x128x128xbf16, #tpu.memory_space<vmem>>, vector<1x128x128xbf16>
    %216 = vector.shape_cast %215 : vector<1x128x128xbf16> to vector<128x128xbf16>
    %cst_127 = arith.constant dense<0.000000e+00> : vector<16x128xf32>
    %217 = tpu.matmul %214, %216, %cst_127 {dimension_numbers = #tpu.dot_dimension_numbers<[1], [0], [0], [1], [0, 0, 1, 1], [], []>} : vector<16x128xbf16>, vector<128x128xbf16>, vector<16x128xf32> -> vector<16x128xf32>
    %c12_128 = arith.constant 12 : index
    %c0_129 = arith.constant 0 : index
    %c0_130 = arith.constant 0 : index
    %218 = vector.load %arg3[%c12_128, %c0_129, %c0_130] : memref<18x1x128xf32, #tpu.memory_space<vmem>>, vector<1x1x128xf32>
    %219 = vector.shape_cast %218 : vector<1x1x128xf32> to vector<1x128xf32>
    %220 = vector.broadcast %219 : vector<1x128xf32> to vector<16x128xf32>
    %221 = arith.addf %217, %220 : vector<16x128xf32>
    %cst_131 = arith.constant 0.000000e+00 : f32
    %222 = vector.broadcast %cst_131 : f32 to vector<16x128xf32>
    %223 = arith.maximumf %221, %222 : vector<16x128xf32>
    %224 = arith.truncf %223 : vector<16x128xf32> to vector<16x128xbf16>
    %c13 = arith.constant 13 : index
    %c0_132 = arith.constant 0 : index
    %c0_133 = arith.constant 0 : index
    %225 = vector.load %arg2[%c13, %c0_132, %c0_133] : memref<18x128x128xbf16, #tpu.memory_space<vmem>>, vector<1x128x128xbf16>
    %226 = vector.shape_cast %225 : vector<1x128x128xbf16> to vector<128x128xbf16>
    %cst_134 = arith.constant dense<0.000000e+00> : vector<16x128xf32>
    %227 = tpu.matmul %224, %226, %cst_134 {dimension_numbers = #tpu.dot_dimension_numbers<[1], [0], [0], [1], [0, 0, 1, 1], [], []>} : vector<16x128xbf16>, vector<128x128xbf16>, vector<16x128xf32> -> vector<16x128xf32>
    %c13_135 = arith.constant 13 : index
    %c0_136 = arith.constant 0 : index
    %c0_137 = arith.constant 0 : index
    %228 = vector.load %arg3[%c13_135, %c0_136, %c0_137] : memref<18x1x128xf32, #tpu.memory_space<vmem>>, vector<1x1x128xf32>
    %229 = vector.shape_cast %228 : vector<1x1x128xf32> to vector<1x128xf32>
    %230 = vector.broadcast %229 : vector<1x128xf32> to vector<16x128xf32>
    %231 = arith.addf %227, %230 : vector<16x128xf32>
    %cst_138 = arith.constant 0.000000e+00 : f32
    %232 = vector.broadcast %cst_138 : f32 to vector<16x128xf32>
    %233 = arith.maximumf %231, %232 : vector<16x128xf32>
    %234 = arith.truncf %233 : vector<16x128xf32> to vector<16x128xbf16>
    %c14 = arith.constant 14 : index
    %c0_139 = arith.constant 0 : index
    %c0_140 = arith.constant 0 : index
    %235 = vector.load %arg2[%c14, %c0_139, %c0_140] : memref<18x128x128xbf16, #tpu.memory_space<vmem>>, vector<1x128x128xbf16>
    %236 = vector.shape_cast %235 : vector<1x128x128xbf16> to vector<128x128xbf16>
    %cst_141 = arith.constant dense<0.000000e+00> : vector<16x128xf32>
    %237 = tpu.matmul %234, %236, %cst_141 {dimension_numbers = #tpu.dot_dimension_numbers<[1], [0], [0], [1], [0, 0, 1, 1], [], []>} : vector<16x128xbf16>, vector<128x128xbf16>, vector<16x128xf32> -> vector<16x128xf32>
    %c14_142 = arith.constant 14 : index
    %c0_143 = arith.constant 0 : index
    %c0_144 = arith.constant 0 : index
    %238 = vector.load %arg3[%c14_142, %c0_143, %c0_144] : memref<18x1x128xf32, #tpu.memory_space<vmem>>, vector<1x1x128xf32>
    %239 = vector.shape_cast %238 : vector<1x1x128xf32> to vector<1x128xf32>
    %240 = vector.broadcast %239 : vector<1x128xf32> to vector<16x128xf32>
    %241 = arith.addf %237, %240 : vector<16x128xf32>
    %242 = arith.addf %241, %213 : vector<16x128xf32>
    %cst_145 = arith.constant dense<0.000000e+00> : vector<16xf32>
    %243 = vector.multi_reduction <add>, %242, %cst_145 [1] : vector<16x128xf32> to vector<16xf32>
    %244 = vector.shape_cast %243 : vector<16xf32> to vector<16x1xf32>
    %cst_146 = arith.constant 1.280000e+02 : f32
    %245 = vector.broadcast %cst_146 : f32 to vector<16x1xf32>
    %246 = arith.divf %244, %245 : vector<16x1xf32>
    %247 = vector.broadcast %246 : vector<16x1xf32> to vector<16x128xf32>
    %248 = arith.subf %242, %247 : vector<16x128xf32>
    %249 = arith.mulf %248, %248 : vector<16x128xf32>
    %cst_147 = arith.constant dense<0.000000e+00> : vector<16xf32>
    %250 = vector.multi_reduction <add>, %249, %cst_147 [1] : vector<16x128xf32> to vector<16xf32>
    %251 = vector.shape_cast %250 : vector<16xf32> to vector<16x1xf32>
    %cst_148 = arith.constant 1.280000e+02 : f32
    %252 = vector.broadcast %cst_148 : f32 to vector<16x1xf32>
    %253 = arith.divf %251, %252 : vector<16x1xf32>
    %cst_149 = arith.constant 9.99999974E-6 : f32
    %254 = vector.broadcast %cst_149 : f32 to vector<16x1xf32>
    %255 = arith.addf %253, %254 : vector<16x1xf32>
    %256 = math.rsqrt %255 : vector<16x1xf32>
    %257 = vector.broadcast %256 : vector<16x1xf32> to vector<16x128xf32>
    %258 = arith.mulf %248, %257 : vector<16x128xf32>
    %c4_150 = arith.constant 4 : index
    %c0_151 = arith.constant 0 : index
    %c0_152 = arith.constant 0 : index
    %259 = vector.load %arg4[%c4_150, %c0_151, %c0_152] : memref<5x1x128xf32, #tpu.memory_space<vmem>>, vector<1x1x128xf32>
    %260 = vector.shape_cast %259 : vector<1x1x128xf32> to vector<1x128xf32>
    %261 = vector.broadcast %260 : vector<1x128xf32> to vector<16x128xf32>
    %262 = arith.mulf %258, %261 : vector<16x128xf32>
    %c4_153 = arith.constant 4 : index
    %c0_154 = arith.constant 0 : index
    %c0_155 = arith.constant 0 : index
    %263 = vector.load %arg5[%c4_153, %c0_154, %c0_155] : memref<5x1x128xf32, #tpu.memory_space<vmem>>, vector<1x1x128xf32>
    %264 = vector.shape_cast %263 : vector<1x1x128xf32> to vector<1x128xf32>
    %265 = vector.broadcast %264 : vector<1x128xf32> to vector<16x128xf32>
    %266 = arith.addf %262, %265 : vector<16x128xf32>
    %267 = arith.truncf %266 : vector<16x128xf32> to vector<16x128xbf16>
    %c15 = arith.constant 15 : index
    %c0_156 = arith.constant 0 : index
    %c0_157 = arith.constant 0 : index
    %268 = vector.load %arg2[%c15, %c0_156, %c0_157] : memref<18x128x128xbf16, #tpu.memory_space<vmem>>, vector<1x128x128xbf16>
    %269 = vector.shape_cast %268 : vector<1x128x128xbf16> to vector<128x128xbf16>
    %cst_158 = arith.constant dense<0.000000e+00> : vector<16x128xf32>
    %270 = tpu.matmul %267, %269, %cst_158 {dimension_numbers = #tpu.dot_dimension_numbers<[1], [0], [0], [1], [0, 0, 1, 1], [], []>} : vector<16x128xbf16>, vector<128x128xbf16>, vector<16x128xf32> -> vector<16x128xf32>
    %c15_159 = arith.constant 15 : index
    %c0_160 = arith.constant 0 : index
    %c0_161 = arith.constant 0 : index
    %271 = vector.load %arg3[%c15_159, %c0_160, %c0_161] : memref<18x1x128xf32, #tpu.memory_space<vmem>>, vector<1x1x128xf32>
    %272 = vector.shape_cast %271 : vector<1x1x128xf32> to vector<1x128xf32>
    %273 = vector.broadcast %272 : vector<1x128xf32> to vector<16x128xf32>
    %274 = arith.addf %270, %273 : vector<16x128xf32>
    %cst_162 = arith.constant 0.000000e+00 : f32
    %275 = vector.broadcast %cst_162 : f32 to vector<16x128xf32>
    %276 = arith.maximumf %274, %275 : vector<16x128xf32>
    %277 = arith.truncf %276 : vector<16x128xf32> to vector<16x128xbf16>
    %c16 = arith.constant 16 : index
    %c0_163 = arith.constant 0 : index
    %c0_164 = arith.constant 0 : index
    %278 = vector.load %arg2[%c16, %c0_163, %c0_164] : memref<18x128x128xbf16, #tpu.memory_space<vmem>>, vector<1x128x128xbf16>
    %279 = vector.shape_cast %278 : vector<1x128x128xbf16> to vector<128x128xbf16>
    %cst_165 = arith.constant dense<0.000000e+00> : vector<16x128xf32>
    %280 = tpu.matmul %277, %279, %cst_165 {dimension_numbers = #tpu.dot_dimension_numbers<[1], [0], [0], [1], [0, 0, 1, 1], [], []>} : vector<16x128xbf16>, vector<128x128xbf16>, vector<16x128xf32> -> vector<16x128xf32>
    %c16_166 = arith.constant 16 : index
    %c0_167 = arith.constant 0 : index
    %c0_168 = arith.constant 0 : index
    %281 = vector.load %arg3[%c16_166, %c0_167, %c0_168] : memref<18x1x128xf32, #tpu.memory_space<vmem>>, vector<1x1x128xf32>
    %282 = vector.shape_cast %281 : vector<1x1x128xf32> to vector<1x128xf32>
    %283 = vector.broadcast %282 : vector<1x128xf32> to vector<16x128xf32>
    %284 = arith.addf %280, %283 : vector<16x128xf32>
    %cst_169 = arith.constant 0.000000e+00 : f32
    %285 = vector.broadcast %cst_169 : f32 to vector<16x128xf32>
    %286 = arith.maximumf %284, %285 : vector<16x128xf32>
    %287 = arith.truncf %286 : vector<16x128xf32> to vector<16x128xbf16>
    %c17 = arith.constant 17 : index
    %c0_170 = arith.constant 0 : index
    %c0_171 = arith.constant 0 : index
    %288 = vector.load %arg2[%c17, %c0_170, %c0_171] : memref<18x128x128xbf16, #tpu.memory_space<vmem>>, vector<1x128x128xbf16>
    %289 = vector.shape_cast %288 : vector<1x128x128xbf16> to vector<128x128xbf16>
    %cst_172 = arith.constant dense<0.000000e+00> : vector<16x128xf32>
    %290 = tpu.matmul %287, %289, %cst_172 {dimension_numbers = #tpu.dot_dimension_numbers<[1], [0], [0], [1], [0, 0, 1, 1], [], []>} : vector<16x128xbf16>, vector<128x128xbf16>, vector<16x128xf32> -> vector<16x128xf32>
    %c17_173 = arith.constant 17 : index
    %c0_174 = arith.constant 0 : index
    %c0_175 = arith.constant 0 : index
    %291 = vector.load %arg3[%c17_173, %c0_174, %c0_175] : memref<18x1x128xf32, #tpu.memory_space<vmem>>, vector<1x1x128xf32>
    %292 = vector.shape_cast %291 : vector<1x1x128xf32> to vector<1x128xf32>
    %293 = vector.broadcast %292 : vector<1x128xf32> to vector<16x128xf32>
    %294 = arith.addf %290, %293 : vector<16x128xf32>
    %295 = arith.addf %294, %266 : vector<16x128xf32>
    %c0_176 = arith.constant 0 : index
    %c0_177 = arith.constant 0 : index
    %296 = vector.load %arg6[%c0_176, %c0_177] : memref<16x128xf32, #tpu.memory_space<vmem>>, vector<16x128xf32>
    tpu.vector_store %arg6[%c0_176, %c0_177], %295 {strides = array<i32>} : memref<16x128xf32, #tpu.memory_space<vmem>>, vector<16x128xf32>,
    return
  }
  func.func @transform_0(%arg0: i32) -> (i32, i32) {
    %c0_i32 = arith.constant 0 : i32
    %c0_i32_0 = arith.constant 0 : i32
    return %arg0, %c0_i32 : i32, i32
  }
  func.func @transform_1(%arg0: i32) -> (i32, i32, i32) {
    %c0_i32 = arith.constant 0 : i32
    %c0_i32_0 = arith.constant 0 : i32
    %c0_i32_1 = arith.constant 0 : i32
    %c0_i32_2 = arith.constant 0 : i32
    return %c0_i32, %c0_i32_0, %c0_i32_1 : i32, i32, i32
  }
  func.func @transform_2(%arg0: i32) -> (i32, i32, i32) {
    %c0_i32 = arith.constant 0 : i32
    %c0_i32_0 = arith.constant 0 : i32
    %c0_i32_1 = arith.constant 0 : i32
    %c0_i32_2 = arith.constant 0 : i32
    return %c0_i32, %c0_i32_0, %c0_i32_1 : i32, i32, i32
  }
  func.func @transform_3(%arg0: i32) -> (i32, i32, i32) {
    %c0_i32 = arith.constant 0 : i32
    %c0_i32_0 = arith.constant 0 : i32
    %c0_i32_1 = arith.constant 0 : i32
    %c0_i32_2 = arith.constant 0 : i32
    return %c0_i32, %c0_i32_0, %c0_i32_1 : i32, i32, i32
  }
  func.func @transform_4(%arg0: i32) -> (i32, i32, i32) {
    %c0_i32 = arith.constant 0 : i32
    %c0_i32_0 = arith.constant 0 : i32
    %c0_i32_1 = arith.constant 0 : i32
    %c0_i32_2 = arith.constant 0 : i32
    return %c0_i32, %c0_i32_0, %c0_i32_1 : i32, i32, i32
  }
  func.func @transform_5(%arg0: i32) -> (i32, i32) {
    %c0_i32 = arith.constant 0 : i32
    %c0_i32_0 = arith.constant 0 : i32
    return %arg0, %c0_i32 : i32, i32
  }
}

</mosaic_0001>

<llo_original>
// kernel: tpu_custom_call.1
$region0: #{tpu_custom_call.1}
  #allocation0 [shape = 'u32[]', space=smem, size = 0x4, offset = 0x4, fixed_abs, tag = 'smem constant byte address 0x4 - core index']
  #allocation1 [shape = 'u32[144,128]{1,0:T(1,128)}', space=vmem, size = 0x12000, scoped, tag = 'internal scratch']
  %s0 = inlined_call_operand.hbm [shape: bf16[16,128], index: 0, kind: input, shape index: {}]
  %s1 = inlined_call_operand.hbm [shape: bf16[18,128,128], index: 1, kind: input, shape index: {}]
  %s2 = inlined_call_operand.hbm [shape: f32[18,1,128], index: 2, kind: input, shape index: {}]
  %s3 = inlined_call_operand.vmem [shape: f32[5,1,128], index: 3, kind: input, shape index: {}]
  %s4 = inlined_call_operand.vmem [shape: f32[5,1,128], index: 4, kind: input, shape index: {}]
  %s5 = inlined_call_operand.hbm [shape: f32[16,128], index: 5, kind: output, shape index: {}]
  %s6 = sld [smem:[#allocation0]]
  $region42: #{tpu_custom_call.1} parent=0
    _
  %s8 = ssub.s32 1, %s6
  %s9 = scalar_select 0, %s8, %s6
  $region1: #{tpu_custom_call.1} parent=0
    #allocation2 [shape = 'u8[4096]{0}', space=vmem, size = 0x1000, scoped, tag = 'input window, operand 0, single buffered']
    #allocation3 [shape = 's32[1]{0}', space=sflag, size = 0x4, scoped, tag = 'scoped memory for tpu_custom_call.1']
    #allocation4 [shape = 's32[1]{0}', space=sflag, size = 0x4, scoped, tag = 'scoped memory for tpu_custom_call.1']
    #allocation5 [shape = 'u8[589824]{0}', space=vmem, size = 0x90000, scoped, tag = 'input window, operand 1, single buffered']
    #allocation6 [shape = 's32[1]{0}', space=sflag, size = 0x4, scoped, tag = 'scoped memory for tpu_custom_call.1']
    #allocation7 [shape = 'u8[9216]{0}', space=vmem, size = 0x2400, scoped, tag = 'input window, operand 2, single buffered']
    #allocation8 [shape = 'u8[8192]{0}', space=vmem, size = 0x2000, scoped, tag = 'output window, operand 0, single buffered']
    %10 = vsyncpa [#allocation3], 0
    %11 = vsyncpa [#allocation6], 0
    %12 = vsyncpa [#allocation4], 0
    // Predicated region
    $region2: #{tpu_custom_call.1} parent=1 // pred_check
      _
    $region3: #{tpu_custom_call.1} parent=1 // pred_check_branch
      %14 = sbr.rel (0) target = $region5
    $region4: #{tpu_custom_call.1} parent=1 // pred_region
      %s16 = ssub.s32 128, 128
      %17 = vsyncadd [#allocation3], %s16
      %s18 = sshll.u32 [#allocation2], 4
      %s19 = int_to_ptr.vmem [resolvable:$true] %s18
      %24 = dma.hbm_to_vmem [thread:$0]  %s0, 128, %s19, [#allocation3], 64, 64, 4
    $region5: #{tpu_custom_call.1} parent=1 // pred_fallthru
      _
    // Predicated region
    $region6: #{tpu_custom_call.1} parent=1 // pred_check
      _
    $region7: #{tpu_custom_call.1} parent=1 // pred_check_branch
      %26 = sbr.rel (0) target = $region9
    $region8: #{tpu_custom_call.1} parent=1 // pred_region
      %s28 = ssub.s32 18432, 18432
      %29 = vsyncadd [#allocation6], %s28
      %s30 = sshll.u32 [#allocation5], 4
      %s31 = int_to_ptr.vmem [resolvable:$true] %s30
      %36 = dma.hbm_to_vmem [thread:$0]  %s1, 18432, %s31, [#allocation6], 64, 64, 4
    $region9: #{tpu_custom_call.1} parent=1 // pred_fallthru
      _
    // Predicated region
    $region10: #{tpu_custom_call.1} parent=1 // pred_check
      _
    $region11: #{tpu_custom_call.1} parent=1 // pred_check_branch
      %38 = sbr.rel (0) target = $region13
    $region12: #{tpu_custom_call.1} parent=1 // pred_region
      %s40 = ssub.s32 288, 288
      %41 = vsyncadd [#allocation6], %s40
      %s42 = sshll.u32 [#allocation7], 4
      %s43 = int_to_ptr.vmem [resolvable:$true] %s42
      %48 = dma.hbm_to_vmem [thread:$0]  %s2, 288, %s43, [#allocation6], 16, 16, 1
    $region13: #{tpu_custom_call.1} parent=1 // pred_fallthru
      _
    // Predicated region
    $region14: #{tpu_custom_call.1} parent=1 // pred_check
      _
    $region15: #{tpu_custom_call.1} parent=1 // pred_check_branch
      %50 = sbr.rel (0) target = $region17
    $region16: #{tpu_custom_call.1} parent=1 // pred_region
      _
    $region17: #{tpu_custom_call.1} parent=1 // pred_fallthru
      _
    // Predicated region
    $region18: #{tpu_custom_call.1} parent=1 // pred_check
      _
    $region19: #{tpu_custom_call.1} parent=1 // pred_check_branch
      %52 = sbr.rel (0) target = $region21
    $region20: #{tpu_custom_call.1} parent=1 // pred_region
      _
    $region21: #{tpu_custom_call.1} parent=1 // pred_fallthru
      _
    // Predicated region
    $region22: #{tpu_custom_call.1} parent=1 // pred_check
      _
    $region23: #{tpu_custom_call.1} parent=1 // pred_check_branch
      %54 = sbr.rel (0) target = $region25
    $region24: #{tpu_custom_call.1} parent=1 // pred_region
      %55 = dma.done [#allocation3], 128
    $region25: #{tpu_custom_call.1} parent=1 // pred_fallthru
      _
    // Predicated region
    $region26: #{tpu_custom_call.1} parent=1 // pred_check
      _
    $region27: #{tpu_custom_call.1} parent=1 // pred_check_branch
      %57 = sbr.rel (0) target = $region29
    $region28: #{tpu_custom_call.1} parent=1 // pred_region
      %58 = dma.done [#allocation6], 18432
    $region29: #{tpu_custom_call.1} parent=1 // pred_fallthru
      _
    // Predicated region
    $region30: #{tpu_custom_call.1} parent=1 // pred_check
      _
    $region31: #{tpu_custom_call.1} parent=1 // pred_check_branch
      %60 = sbr.rel (0) target = $region33
    $region32: #{tpu_custom_call.1} parent=1 // pred_region
      %61 = dma.done [#allocation6], 288
    $region33: #{tpu_custom_call.1} parent=1 // pred_fallthru
      _
    %v63 = vld [vmem:[#allocation2] sm:$0xf]
    %v64 = vld [vmem:[#allocation2 + $0x4] sm:$0xf]
    %v65 = vunpack.c.l.bf16 %v63
    %v66 = vunpack.c.l.bf16 %v64
    %v67 = vld [vmem:[#allocation5] sm:$0xf]
    %v68 = vld [vmem:[#allocation5 + $0x4] sm:$0xf]
    %v69 = vld [vmem:[#allocation5 + $0x8] sm:$0xf]
    %v70 = vld [vmem:[#allocation5 + $0xc] sm:$0xf]
    %v71 = vld [vmem:[#allocation5 + $0x10] sm:$0xf]
    %v72 = vld [vmem:[#allocation5 + $0x14] sm:$0xf]
    %v73 = vld [vmem:[#allocation5 + $0x18] sm:$0xf]
    %v74 = vld [vmem:[#allocation5 + $0x1c] sm:$0xf]
    %v75 = vld [vmem:[#allocation5 + $0x20] sm:$0xf]
    %v76 = vld [vmem:[#allocation5 + $0x24] sm:$0xf]
    %v77 = vld [vmem:[#allocation5 + $0x28] sm:$0xf]
    %v78 = vld [vmem:[#allocation5 + $0x2c] sm:$0xf]
    %v79 = vld [vmem:[#allocation5 + $0x30] sm:$0xf]
    %v80 = vld [vmem:[#allocation5 + $0x34] sm:$0xf]
    %v81 = vld [vmem:[#allocation5 + $0x38] sm:$0xf]
    %v82 = vld [vmem:[#allocation5 + $0x3c] sm:$0xf]
    %v83 = vld [vmem:[#allocation7] sm:$0x1]
    %v85 = vlaneseq
    %v86 = vshrl.u32 %v85, 7
    %v87 = vsub.s32 0, %v86
    %v88 = vrot.slane %v83, %v87
    %v92 = vunpack.c.l.b16 %v63
    %v93 = vunpack.c.l.b16 %v64
    %v94 = vpack.c.b16 %v93, %v92
    %v112 = vunpack.c.l.b16 %v67
    %v113 = vunpack.c.l.b16 %v68
    %v114 = vunpack.c.l.b16 %v69
    %v115 = vunpack.c.l.b16 %v70
    %v116 = vunpack.c.l.b16 %v71
    %v117 = vunpack.c.l.b16 %v72
    %v118 = vunpack.c.l.b16 %v73
    %v119 = vunpack.c.l.b16 %v74
    %v120 = vunpack.c.l.b16 %v75
    %v121 = vunpack.c.l.b16 %v76
    %v122 = vunpack.c.l.b16 %v77
    %v123 = vunpack.c.l.b16 %v78
    %v124 = vunpack.c.l.b16 %v79
    %v125 = vunpack.c.l.b16 %v80
    %v126 = vunpack.c.l.b16 %v81
    %v127 = vunpack.c.l.b16 %v82
    %v128 = vpack.c.b16 %v113, %v112
    %v129 = vpack.c.b16 %v115, %v114
    %v130 = vpack.c.b16 %v117, %v116
    %v131 = vpack.c.b16 %v119, %v118
    %v132 = vpack.c.b16 %v121, %v120
    %v133 = vpack.c.b16 %v123, %v122
    %v134 = vpack.c.b16 %v125, %v124
    %v135 = vpack.c.b16 %v127, %v126
    %144 = vmatprep.subr.bf16.mxu0 0
    %145 = vmatpush1.bf16.msra.mxu0 %v128
    %146 = vmatprep.subr.bf16.mxu0 0
    %147 = vmatpush1.bf16.msra.mxu0 %v129
    %148 = vmatprep.subr.bf16.mxu0 0
    %149 = vmatpush1.bf16.msra.mxu0 %v130
    %150 = vmatprep.subr.bf16.mxu0 0
    %151 = vmatpush1.bf16.msra.mxu0 %v131
    %152 = vmatprep.subr.bf16.mxu0 0
    %153 = vmatpush1.bf16.msra.mxu0 %v132
    %154 = vmatprep.subr.bf16.mxu0 0
    %155 = vmatpush1.bf16.msra.mxu0 %v133
    %156 = vmatprep.subr.bf16.mxu0 0
    %157 = vmatpush1.bf16.msra.mxu0 %v134
    %158 = vmatprep.subr.bf16.mxu0 0
    %159 = vmatpush1.bf16.msra.mxu0 %v135
    %160 = vmatprep.subr.bf16.mxu0 0
    %161 = vmatpush1.bf16.msra.mxu0 0
    %162 = vmatprep.subr.bf16.mxu0 0
    %163 = vmatpush1.bf16.msra.mxu0 0
    %164 = vmatprep.subr.bf16.mxu0 0
    %165 = vmatpush1.bf16.msra.mxu0 0
    %166 = vmatprep.subr.bf16.mxu0 0
    %167 = vmatpush1.bf16.msra.mxu0 0
    %168 = vmatprep.subr.bf16.mxu0 0
    %169 = vmatpush1.bf16.msra.mxu0 0
    %170 = vmatprep.subr.bf16.mxu0 0
    %171 = vmatpush1.bf16.msra.mxu0 0
    %172 = vmatprep.subr.bf16.mxu0 0
    %173 = vmatpush1.bf16.msra.mxu0 0
    %174 = vmatprep.subr.bf16.mxu0 0
    %175 = vmatpush1.bf16.msra.mxu0 0
    %176 = vmatprep.mubr.bf16.mxu0 0
    %177 = vmatmul.mubr.bf16.gmra.mrb[0].mxu0 %v94
    %v178 = vpop.f32.mrb[0].mxu0
    %v179 = vadd.f32 %v88, %v178
    %v180 = vpop.f32.mrb[0].mxu0
    %v181 = vpop.f32.mrb[0].mxu0
    %v182 = vadd.f32 %v88, %v181
    %v183 = vpop.f32.mrb[0].mxu0
    %184 = vdwg.mxu0
    %v185 = vmax.f32 %v179, 0.0
    %v186 = vmax.f32 %v182, 0.0
    %v187 = vpack.c.bf16 %v186, %v185
    %s188 = scalar_lea.vmem [#allocation5], 64
    %v189 = vld [vmem:[%s188] sm:$0xf]
    %v190 = vld [vmem:[%s188 + $0x4] sm:$0xf]
    %v191 = vld [vmem:[%s188 + $0x8] sm:$0xf]
    %v192 = vld [vmem:[%s188 + $0xc] sm:$0xf]
    %v193 = vld [vmem:[%s188 + $0x10] sm:$0xf]
    %v194 = vld [vmem:[%s188 + $0x14] sm:$0xf]
    %v195 = vld [vmem:[%s188 + $0x18] sm:$0xf]
    %v196 = vld [vmem:[%s188 + $0x1c] sm:$0xf]
    %v197 = vld [vmem:[%s188 + $0x20] sm:$0xf]
    %v198 = vld [vmem:[%s188 + $0x24] sm:$0xf]
    %v199 = vld [vmem:[%s188 + $0x28] sm:$0xf]
    %v200 = vld [vmem:[%s188 + $0x2c] sm:$0xf]
    %v201 = vld [vmem:[%s188 + $0x30] sm:$0xf]
    %v202 = vld [vmem:[%s188 + $0x34] sm:$0xf]
    %v203 = vld [vmem:[%s188 + $0x38] sm:$0xf]
    %v204 = vld [vmem:[%s188 + $0x3c] sm:$0xf]
    %s205 = scalar_lea.vmem [#allocation7], 1
    %v206 = vld [vmem:[%s205] sm:$0x1]
    %v208 = vlaneseq
    %v209 = vshrl.u32 %v208, 7
    %v210 = vsub.s32 0, %v209
    %v211 = vrot.slane %v206, %v210
    %v229 = vunpack.c.l.b16 %v189
    %v230 = vunpack.c.l.b16 %v190
    %v231 = vunpack.c.l.b16 %v191
    %v232 = vunpack.c.l.b16 %v192
    %v233 = vunpack.c.l.b16 %v193
    %v234 = vunpack.c.l.b16 %v194
    %v235 = vunpack.c.l.b16 %v195
    %v236 = vunpack.c.l.b16 %v196
    %v237 = vunpack.c.l.b16 %v197
    %v238 = vunpack.c.l.b16 %v198
    %v239 = vunpack.c.l.b16 %v199
    %v240 = vunpack.c.l.b16 %v200
    %v241 = vunpack.c.l.b16 %v201
    %v242 = vunpack.c.l.b16 %v202
    %v243 = vunpack.c.l.b16 %v203
    %v244 = vunpack.c.l.b16 %v204
    %v245 = vpack.c.b16 %v230, %v229
    %v246 = vpack.c.b16 %v232, %v231
    %v247 = vpack.c.b16 %v234, %v233
    %v248 = vpack.c.b16 %v236, %v235
    %v249 = vpack.c.b16 %v238, %v237
    %v250 = vpack.c.b16 %v240, %v239
    %v251 = vpack.c.b16 %v242, %v241
    %v252 = vpack.c.b16 %v244, %v243
    %261 = vmatprep.subr.bf16.mxu0 0
    %262 = vmatpush1.bf16.msra.mxu0 %v245
    %263 = vmatprep.subr.bf16.mxu0 0
    %264 = vmatpush1.bf16.msra.mxu0 %v246
    %265 = vmatprep.subr.bf16.mxu0 0
    %266 = vmatpush1.bf16.msra.mxu0 %v247
    %267 = vmatprep.subr.bf16.mxu0 0
    %268 = vmatpush1.bf16.msra.mxu0 %v248
    %269 = vmatprep.subr.bf16.mxu0 0
    %270 = vmatpush1.bf16.msra.mxu0 %v249
    %271 = vmatprep.subr.bf16.mxu0 0
    %272 = vmatpush1.bf16.msra.mxu0 %v250
    %273 = vmatprep.subr.bf16.mxu0 0
    %274 = vmatpush1.bf16.msra.mxu0 %v251
    %275 = vmatprep.subr.bf16.mxu0 0
    %276 = vmatpush1.bf16.msra.mxu0 %v252
    %277 = vmatprep.subr.bf16.mxu0 0
    %278 = vmatpush1.bf16.msra.mxu0 0
    %279 = vmatprep.subr.bf16.mxu0 0
    %280 = vmatpush1.bf16.msra.mxu0 0
    %281 = vmatprep.subr.bf16.mxu0 0
    %282 = vmatpush1.bf16.msra.mxu0 0
    %283 = vmatprep.subr.bf16.mxu0 0
    %284 = vmatpush1.bf16.msra.mxu0 0
    %285 = vmatprep.subr.bf16.mxu0 0
    %286 = vmatpush1.bf16.msra.mxu0 0
    %287 = vmatprep.subr.bf16.mxu0 0
    %288 = vmatpush1.bf16.msra.mxu0 0
    %289 = vmatprep.subr.bf16.mxu0 0
    %290 = vmatpush1.bf16.msra.mxu0 0
    %291 = vmatprep.subr.bf16.mxu0 0
    %292 = vmatpush1.bf16.msra.mxu0 0
    %293 = vmatprep.mubr.bf16.mxu0 0
    %294 = vmatmul.mubr.bf16.gmra.mrb[0].mxu0 %v187
    %v295 = vpop.f32.mrb[0].mxu0
    %v296 = vadd.f32 %v211, %v295
    %v297 = vpop.f32.mrb[0].mxu0
    %v298 = vpop.f32.mrb[0].mxu0
    %v299 = vadd.f32 %v211, %v298
    %v300 = vpop.f32.mrb[0].mxu0
    %301 = vdwg.mxu0
    %v302 = vmax.f32 %v296, 0.0
    %v303 = vmax.f32 %v299, 0.0
    %v304 = vpack.c.bf16 %v303, %v302
    %s305 = scalar_lea.vmem [#allocation5], 128
    %v306 = vld [vmem:[%s305] sm:$0xf]
    %v307 = vld [vmem:[%s305 + $0x4] sm:$0xf]
    %v308 = vld [vmem:[%s305 + $0x8] sm:$0xf]
    %v309 = vld [vmem:[%s305 + $0xc] sm:$0xf]
    %v310 = vld [vmem:[%s305 + $0x10] sm:$0xf]
    %v311 = vld [vmem:[%s305 + $0x14] sm:$0xf]
    %v312 = vld [vmem:[%s305 + $0x18] sm:$0xf]
    %v313 = vld [vmem:[%s305 + $0x1c] sm:$0xf]
    %v314 = vld [vmem:[%s305 + $0x20] sm:$0xf]
    %v315 = vld [vmem:[%s305 + $0x24] sm:$0xf]
    %v316 = vld [vmem:[%s305 + $0x28] sm:$0xf]
    %v317 = vld [vmem:[%s305 + $0x2c] sm:$0xf]
    %v318 = vld [vmem:[%s305 + $0x30] sm:$0xf]
    %v319 = vld [vmem:[%s305 + $0x34] sm:$0xf]
    %v320 = vld [vmem:[%s305 + $0x38] sm:$0xf]
    %v321 = vld [vmem:[%s305 + $0x3c] sm:$0xf]
    %s322 = scalar_lea.vmem [#allocation7], 2
    %v323 = vld [vmem:[%s322] sm:$0x1]
    %v325 = vlaneseq
    %v326 = vshrl.u32 %v325, 7
    %v327 = vsub.s32 0, %v326
    %v328 = vrot.slane %v323, %v327
    %v346 = vunpack.c.l.b16 %v306
    %v347 = vunpack.c.l.b16 %v307
    %v348 = vunpack.c.l.b16 %v308
    %v349 = vunpack.c.l.b16 %v309
    %v350 = vunpack.c.l.b16 %v310
    %v351 = vunpack.c.l.b16 %v311
    %v352 = vunpack.c.l.b16 %v312
    %v353 = vunpack.c.l.b16 %v313
    %v354 = vunpack.c.l.b16 %v314
    %v355 = vunpack.c.l.b16 %v315
    %v356 = vunpack.c.l.b16 %v316
    %v357 = vunpack.c.l.b16 %v317
    %v358 = vunpack.c.l.b16 %v318
    %v359 = vunpack.c.l.b16 %v319
    %v360 = vunpack.c.l.b16 %v320
    %v361 = vunpack.c.l.b16 %v321
    %v362 = vpack.c.b16 %v347, %v346
    %v363 = vpack.c.b16 %v349, %v348
    %v364 = vpack.c.b16 %v351, %v350
    %v365 = vpack.c.b16 %v353, %v352
    %v366 = vpack.c.b16 %v355, %v354
    %v367 = vpack.c.b16 %v357, %v356
    %v368 = vpack.c.b16 %v359, %v358
    %v369 = vpack.c.b16 %v361, %v360
    %378 = vmatprep.subr.bf16.mxu0 0
    %379 = vmatpush1.bf16.msra.mxu0 %v362
    %380 = vmatprep.subr.bf16.mxu0 0
    %381 = vmatpush1.bf16.msra.mxu0 %v363
    %382 = vmatprep.subr.bf16.mxu0 0
    %383 = vmatpush1.bf16.msra.mxu0 %v364
    %384 = vmatprep.subr.bf16.mxu0 0
    %385 = vmatpush1.bf16.msra.mxu0 %v365
    %386 = vmatprep.subr.bf16.mxu0 0
    %387 = vmatpush1.bf16.msra.mxu0 %v366
    %388 = vmatprep.subr.bf16.mxu0 0
    %389 = vmatpush1.bf16.msra.mxu0 %v367
    %390 = vmatprep.subr.bf16.mxu0 0
    %391 = vmatpush1.bf16.msra.mxu0 %v368
    %392 = vmatprep.subr.bf16.mxu0 0
    %393 = vmatpush1.bf16.msra.mxu0 %v369
    %394 = vmatprep.subr.bf16.mxu0 0
    %395 = vmatpush1.bf16.msra.mxu0 0
    %396 = vmatprep.subr.bf16.mxu0 0
    %397 = vmatpush1.bf16.msra.mxu0 0
    %398 = vmatprep.subr.bf16.mxu0 0
    %399 = vmatpush1.bf16.msra.mxu0 0
    %400 = vmatprep.subr.bf16.mxu0 0
    %401 = vmatpush1.bf16.msra.mxu0 0
    %402 = vmatprep.subr.bf16.mxu0 0
    %403 = vmatpush1.bf16.msra.mxu0 0
    %404 = vmatprep.subr.bf16.mxu0 0
    %405 = vmatpush1.bf16.msra.mxu0 0
    %406 = vmatprep.subr.bf16.mxu0 0
    %407 = vmatpush1.bf16.msra.mxu0 0
    %408 = vmatprep.subr.bf16.mxu0 0
    %409 = vmatpush1.bf16.msra.mxu0 0
    %410 = vmatprep.mubr.bf16.mxu0 0
    %411 = vmatmul.mubr.bf16.gmra.mrb[0].mxu0 %v304
    %v412 = vpop.f32.mrb[0].mxu0
    %v413 = vadd.f32 %v328, %v412
    %v414 = vpop.f32.mrb[0].mxu0
    %v415 = vpop.f32.mrb[0].mxu0
    %v416 = vadd.f32 %v328, %v415
    %v417 = vpop.f32.mrb[0].mxu0
    %418 = vdwg.mxu0
    %v419 = vadd.f32 %v413, %v65
    %v420 = vadd.f32 %v416, %v66
    %421 = vadd.xlane.f32.xlu0 %v419
    %v422 = vpop.xlane.xlu0 %421
    %423 = vadd.xlane.f32.xlu0 %v420
    %v424 = vpop.xlane.xlu0 %423
    %v425 = vrcp.pop 128.0
    %v426 = vmul.f32 %v422, %v425
    %v427 = vmul.f32 %v424, %v425
    %v428 = vsub.f32 %v419, %v426
    %v429 = vsub.f32 %v420, %v427
    %v430 = vmul.f32 %v428, %v428
    %v431 = vmul.f32 %v429, %v429
    %432 = vadd.xlane.f32.xlu0 %v430
    %v433 = vpop.xlane.xlu0 %432
    %434 = vadd.xlane.f32.xlu0 %v431
    %v435 = vpop.xlane.xlu0 %434
    %v436 = vmul.f32 %v433, %v425
    %v437 = vmul.f32 %v435, %v425
    %v438 = vadd.f32 %v436, 1e-05
    %v439 = vadd.f32 %v437, 1e-05
    %v440 = vrsqrt.pop %v438
    %v441 = vrsqrt.pop %v439
    %v442 = vmul.f32 %v428, %v440
    %v443 = vmul.f32 %v429, %v441
    %v444 = vld [vmem:[%s3] sm:$0x1]
    %v446 = vlaneseq
    %v447 = vshrl.u32 %v446, 7
    %v448 = vsub.s32 0, %v447
    %v449 = vrot.slane %v444, %v448
    %v451 = vmul.f32 %v442, %v449
    %v452 = vmul.f32 %v443, %v449
    %v453 = vld [vmem:[%s4] sm:$0x1]
    %v455 = vlaneseq
    %v456 = vshrl.u32 %v455, 7
    %v457 = vsub.s32 0, %v456
    %v458 = vrot.slane %v453, %v457
    %v460 = vadd.f32 %v451, %v458
    %v461 = vadd.f32 %v452, %v458
    %v462 = vpack.c.bf16 %v461, %v460
    %s463 = scalar_lea.vmem [#allocation5], 192
    %v464 = vld [vmem:[%s463] sm:$0xf]
    %v465 = vld [vmem:[%s463 + $0x4] sm:$0xf]
    %v466 = vld [vmem:[%s463 + $0x8] sm:$0xf]
    %v467 = vld [vmem:[%s463 + $0xc] sm:$0xf]
    %v468 = vld [vmem:[%s463 + $0x10] sm:$0xf]
    %v469 = vld [vmem:[%s463 + $0x14] sm:$0xf]
    %v470 = vld [vmem:[%s463 + $0x18] sm:$0xf]
    %v471 = vld [vmem:[%s463 + $0x1c] sm:$0xf]
    %v472 = vld [vmem:[%s463 + $0x20] sm:$0xf]
    %v473 = vld [vmem:[%s463 + $0x24] sm:$0xf]
    %v474 = vld [vmem:[%s463 + $0x28] sm:$0xf]
    %v475 = vld [vmem:[%s463 + $0x2c] sm:$0xf]
    %v476 = vld [vmem:[%s463 + $0x30] sm:$0xf]
    %v477 = vld [vmem:[%s463 + $0x34] sm:$0xf]
    %v478 = vld [vmem:[%s463 + $0x38] sm:$0xf]
    %v479 = vld [vmem:[%s463 + $0x3c] sm:$0xf]
    %s480 = scalar_lea.vmem [#allocation7], 3
    %v481 = vld [vmem:[%s480] sm:$0x1]
    %v483 = vlaneseq
    %v484 = vshrl.u32 %v483, 7
    %v485 = vsub.s32 0, %v484
    %v486 = vrot.slane %v481, %v485
    %v504 = vunpack.c.l.b16 %v464
    %v505 = vunpack.c.l.b16 %v465
    %v506 = vunpack.c.l.b16 %v466
    %v507 = vunpack.c.l.b16 %v467
    %v508 = vunpack.c.l.b16 %v468
    %v509 = vunpack.c.l.b16 %v469
    %v510 = vunpack.c.l.b16 %v470
    %v511 = vunpack.c.l.b16 %v471
    %v512 = vunpack.c.l.b16 %v472
    %v513 = vunpack.c.l.b16 %v473
    %v514 = vunpack.c.l.b16 %v474
    %v515 = vunpack.c.l.b16 %v475
    %v516 = vunpack.c.l.b16 %v476
    %v517 = vunpack.c.l.b16 %v477
    %v518 = vunpack.c.l.b16 %v478
    %v519 = vunpack.c.l.b16 %v479
    %v520 = vpack.c.b16 %v505, %v504
    %v521 = vpack.c.b16 %v507, %v506
    %v522 = vpack.c.b16 %v509, %v508
    %v523 = vpack.c.b16 %v511, %v510
    %v524 = vpack.c.b16 %v513, %v512
    %v525 = vpack.c.b16 %v515, %v514
    %v526 = vpack.c.b16 %v517, %v516
    %v527 = vpack.c.b16 %v519, %v518
    %536 = vmatprep.subr.bf16.mxu0 0
    %537 = vmatpush1.bf16.msra.mxu0 %v520
    %538 = vmatprep.subr.bf16.mxu0 0
    %539 = vmatpush1.bf16.msra.mxu0 %v521
    %540 = vmatprep.subr.bf16.mxu0 0
    %541 = vmatpush1.bf16.msra.mxu0 %v522
    %542 = vmatprep.subr.bf16.mxu0 0
    %543 = vmatpush1.bf16.msra.mxu0 %v523
    %544 = vmatprep.subr.bf16.mxu0 0
    %545 = vmatpush1.bf16.msra.mxu0 %v524
    %546 = vmatprep.subr.bf16.mxu0 0
    %547 = vmatpush1.bf16.msra.mxu0 %v525
    %548 = vmatprep.subr.bf16.mxu0 0
    %549 = vmatpush1.bf16.msra.mxu0 %v526
    %550 = vmatprep.subr.bf16.mxu0 0
    %551 = vmatpush1.bf16.msra.mxu0 %v527
    %552 = vmatprep.subr.bf16.mxu0 0
    %553 = vmatpush1.bf16.msra.mxu0 0
    %554 = vmatprep.subr.bf16.mxu0 0
    %555 = vmatpush1.bf16.msra.mxu0 0
    %556 = vmatprep.subr.bf16.mxu0 0
    %557 = vmatpush1.bf16.msra.mxu0 0
    %558 = vmatprep.subr.bf16.mxu0 0
    %559 = vmatpush1.bf16.msra.mxu0 0
    %560 = vmatprep.subr.bf16.mxu0 0
    %561 = vmatpush1.bf16.msra.mxu0 0
    %562 = vmatprep.subr.bf16.mxu0 0
    %563 = vmatpush1.bf16.msra.mxu0 0
    %564 = vmatprep.subr.bf16.mxu0 0
    %565 = vmatpush1.bf16.msra.mxu0 0
    %566 = vmatprep.subr.bf16.mxu0 0
    %567 = vmatpush1.bf16.msra.mxu0 0
    %568 = vmatprep.mubr.bf16.mxu0 0
    %569 = vmatmul.mubr.bf16.gmra.mrb[0].mxu0 %v462
    %v570 = vpop.f32.mrb[0].mxu0
    %v571 = vadd.f32 %v486, %v570
    %v572 = vpop.f32.mrb[0].mxu0
    %v573 = vpop.f32.mrb[0].mxu0
    %v574 = vadd.f32 %v486, %v573
    %v575 = vpop.f32.mrb[0].mxu0
    %576 = vdwg.mxu0
    %v577 = vmax.f32 %v571, 0.0
    %v578 = vmax.f32 %v574, 0.0
    %v579 = vpack.c.bf16 %v578, %v577
    %s580 = scalar_lea.vmem [#allocation5], 256
    %v581 = vld [vmem:[%s580] sm:$0xf]
    %v582 = vld [vmem:[%s580 + $0x4] sm:$0xf]
    %v583 = vld [vmem:[%s580 + $0x8] sm:$0xf]
    %v584 = vld [vmem:[%s580 + $0xc] sm:$0xf]
    %v585 = vld [vmem:[%s580 + $0x10] sm:$0xf]
    %v586 = vld [vmem:[%s580 + $0x14] sm:$0xf]
    %v587 = vld [vmem:[%s580 + $0x18] sm:$0xf]
    %v588 = vld [vmem:[%s580 + $0x1c] sm:$0xf]
    %v589 = vld [vmem:[%s580 + $0x20] sm:$0xf]
    %v590 = vld [vmem:[%s580 + $0x24] sm:$0xf]
    %v591 = vld [vmem:[%s580 + $0x28] sm:$0xf]
    %v592 = vld [vmem:[%s580 + $0x2c] sm:$0xf]
    %v593 = vld [vmem:[%s580 + $0x30] sm:$0xf]
    %v594 = vld [vmem:[%s580 + $0x34] sm:$0xf]
    %v595 = vld [vmem:[%s580 + $0x38] sm:$0xf]
    %v596 = vld [vmem:[%s580 + $0x3c] sm:$0xf]
    %s597 = scalar_lea.vmem [#allocation7], 4
    %v598 = vld [vmem:[%s597] sm:$0x1]
    %v600 = vlaneseq
    %v601 = vshrl.u32 %v600, 7
    %v602 = vsub.s32 0, %v601
    %v603 = vrot.slane %v598, %v602
    %v621 = vunpack.c.l.b16 %v581
    %v622 = vunpack.c.l.b16 %v582
    %v623 = vunpack.c.l.b16 %v583
    %v624 = vunpack.c.l.b16 %v584
    %v625 = vunpack.c.l.b16 %v585
    %v626 = vunpack.c.l.b16 %v586
    %v627 = vunpack.c.l.b16 %v587
    %v628 = vunpack.c.l.b16 %v588
    %v629 = vunpack.c.l.b16 %v589
    %v630 = vunpack.c.l.b16 %v590
    %v631 = vunpack.c.l.b16 %v591
    %v632 = vunpack.c.l.b16 %v592
    %v633 = vunpack.c.l.b16 %v593
    %v634 = vunpack.c.l.b16 %v594
    %v635 = vunpack.c.l.b16 %v595
    %v636 = vunpack.c.l.b16 %v596
    %v637 = vpack.c.b16 %v622, %v621
    %v638 = vpack.c.b16 %v624, %v623
    %v639 = vpack.c.b16 %v626, %v625
    %v640 = vpack.c.b16 %v628, %v627
    %v641 = vpack.c.b16 %v630, %v629
    %v642 = vpack.c.b16 %v632, %v631
    %v643 = vpack.c.b16 %v634, %v633
    %v644 = vpack.c.b16 %v636, %v635
    %653 = vmatprep.subr.bf16.mxu0 0
    %654 = vmatpush1.bf16.msra.mxu0 %v637
    %655 = vmatprep.subr.bf16.mxu0 0
    %656 = vmatpush1.bf16.msra.mxu0 %v638
    %657 = vmatprep.subr.bf16.mxu0 0
    %658 = vmatpush1.bf16.msra.mxu0 %v639
    %659 = vmatprep.subr.bf16.mxu0 0
    %660 = vmatpush1.bf16.msra.mxu0 %v640
    %661 = vmatprep.subr.bf16.mxu0 0
    %662 = vmatpush1.bf16.msra.mxu0 %v641
    %663 = vmatprep.subr.bf16.mxu0 0
    %664 = vmatpush1.bf16.msra.mxu0 %v642
    %665 = vmatprep.subr.bf16.mxu0 0
    %666 = vmatpush1.bf16.msra.mxu0 %v643
    %667 = vmatprep.subr.bf16.mxu0 0
    %668 = vmatpush1.bf16.msra.mxu0 %v644
    %669 = vmatprep.subr.bf16.mxu0 0
    %670 = vmatpush1.bf16.msra.mxu0 0
    %671 = vmatprep.subr.bf16.mxu0 0
    %672 = vmatpush1.bf16.msra.mxu0 0
    %673 = vmatprep.subr.bf16.mxu0 0
    %674 = vmatpush1.bf16.msra.mxu0 0
    %675 = vmatprep.subr.bf16.mxu0 0
    %676 = vmatpush1.bf16.msra.mxu0 0
    %677 = vmatprep.subr.bf16.mxu0 0
    %678 = vmatpush1.bf16.msra.mxu0 0
    %679 = vmatprep.subr.bf16.mxu0 0
    %680 = vmatpush1.bf16.msra.mxu0 0
    %681 = vmatprep.subr.bf16.mxu0 0
    %682 = vmatpush1.bf16.msra.mxu0 0
    %683 = vmatprep.subr.bf16.mxu0 0
    %684 = vmatpush1.bf16.msra.mxu0 0
    %685 = vmatprep.mubr.bf16.mxu0 0
    %686 = vmatmul.mubr.bf16.gmra.mrb[0].mxu0 %v579
    %v687 = vpop.f32.mrb[0].mxu0
    %v688 = vadd.f32 %v603, %v687
    %v689 = vpop.f32.mrb[0].mxu0
    %v690 = vpop.f32.mrb[0].mxu0
    %v691 = vadd.f32 %v603, %v690
    %v692 = vpop.f32.mrb[0].mxu0
    %693 = vdwg.mxu0
    %v694 = vmax.f32 %v688, 0.0
    %v695 = vmax.f32 %v691, 0.0
    %v696 = vpack.c.bf16 %v695, %v694
    %s697 = scalar_lea.vmem [#allocation5], 320
    %v698 = vld [vmem:[%s697] sm:$0xf]
    %v699 = vld [vmem:[%s697 + $0x4] sm:$0xf]
    %v700 = vld [vmem:[%s697 + $0x8] sm:$0xf]
    %v701 = vld [vmem:[%s697 + $0xc] sm:$0xf]
    %v702 = vld [vmem:[%s697 + $0x10] sm:$0xf]
    %v703 = vld [vmem:[%s697 + $0x14] sm:$0xf]
    %v704 = vld [vmem:[%s697 + $0x18] sm:$0xf]
    %v705 = vld [vmem:[%s697 + $0x1c] sm:$0xf]
    %v706 = vld [vmem:[%s697 + $0x20] sm:$0xf]
    %v707 = vld [vmem:[%s697 + $0x24] sm:$0xf]
    %v708 = vld [vmem:[%s697 + $0x28] sm:$0xf]
    %v709 = vld [vmem:[%s697 + $0x2c] sm:$0xf]
    %v710 = vld [vmem:[%s697 + $0x30] sm:$0xf]
    %v711 = vld [vmem:[%s697 + $0x34] sm:$0xf]
    %v712 = vld [vmem:[%s697 + $0x38] sm:$0xf]
    %v713 = vld [vmem:[%s697 + $0x3c] sm:$0xf]
    %s714 = scalar_lea.vmem [#allocation7], 5
    %v715 = vld [vmem:[%s714] sm:$0x1]
    %v717 = vlaneseq
    %v718 = vshrl.u32 %v717, 7
    %v719 = vsub.s32 0, %v718
    %v720 = vrot.slane %v715, %v719
    %v738 = vunpack.c.l.b16 %v698
    %v739 = vunpack.c.l.b16 %v699
    %v740 = vunpack.c.l.b16 %v700
    %v741 = vunpack.c.l.b16 %v701
    %v742 = vunpack.c.l.b16 %v702
    %v743 = vunpack.c.l.b16 %v703
    %v744 = vunpack.c.l.b16 %v704
    %v745 = vunpack.c.l.b16 %v705
    %v746 = vunpack.c.l.b16 %v706
    %v747 = vunpack.c.l.b16 %v707
    %v748 = vunpack.c.l.b16 %v708
    %v749 = vunpack.c.l.b16 %v709
    %v750 = vunpack.c.l.b16 %v710
    %v751 = vunpack.c.l.b16 %v711
    %v752 = vunpack.c.l.b16 %v712
    %v753 = vunpack.c.l.b16 %v713
    %v754 = vpack.c.b16 %v739, %v738
    %v755 = vpack.c.b16 %v741, %v740
    %v756 = vpack.c.b16 %v743, %v742
    %v757 = vpack.c.b16 %v745, %v744
    %v758 = vpack.c.b16 %v747, %v746
    %v759 = vpack.c.b16 %v749, %v748
    %v760 = vpack.c.b16 %v751, %v750
    %v761 = vpack.c.b16 %v753, %v752
    %770 = vmatprep.subr.bf16.mxu0 0
    %771 = vmatpush1.bf16.msra.mxu0 %v754
    %772 = vmatprep.subr.bf16.mxu0 0
    %773 = vmatpush1.bf16.msra.mxu0 %v755
    %774 = vmatprep.subr.bf16.mxu0 0
    %775 = vmatpush1.bf16.msra.mxu0 %v756
    %776 = vmatprep.subr.bf16.mxu0 0
    %777 = vmatpush1.bf16.msra.mxu0 %v757
    %778 = vmatprep.subr.bf16.mxu0 0
    %779 = vmatpush1.bf16.msra.mxu0 %v758
    %780 = vmatprep.subr.bf16.mxu0 0
    %781 = vmatpush1.bf16.msra.mxu0 %v759
    %782 = vmatprep.subr.bf16.mxu0 0
    %783 = vmatpush1.bf16.msra.mxu0 %v760
    %784 = vmatprep.subr.bf16.mxu0 0
    %785 = vmatpush1.bf16.msra.mxu0 %v761
    %786 = vmatprep.subr.bf16.mxu0 0
    %787 = vmatpush1.bf16.msra.mxu0 0
    %788 = vmatprep.subr.bf16.mxu0 0
    %789 = vmatpush1.bf16.msra.mxu0 0
    %790 = vmatprep.subr.bf16.mxu0 0
    %791 = vmatpush1.bf16.msra.mxu0 0
    %792 = vmatprep.subr.bf16.mxu0 0
    %793 = vmatpush1.bf16.msra.mxu0 0
    %794 = vmatprep.subr.bf16.mxu0 0
    %795 = vmatpush1.bf16.msra.mxu0 0
    %796 = vmatprep.subr.bf16.mxu0 0
    %797 = vmatpush1.bf16.msra.mxu0 0
    %798 = vmatprep.subr.bf16.mxu0 0
    %799 = vmatpush1.bf16.msra.mxu0 0
    %800 = vmatprep.subr.bf16.mxu0 0
    %801 = vmatpush1.bf16.msra.mxu0 0
    %802 = vmatprep.mubr.bf16.mxu0 0
    %803 = vmatmul.mubr.bf16.gmra.mrb[0].mxu0 %v696
    %v804 = vpop.f32.mrb[0].mxu0
    %v805 = vadd.f32 %v720, %v804
    %v806 = vpop.f32.mrb[0].mxu0
    %v807 = vpop.f32.mrb[0].mxu0
    %v808 = vadd.f32 %v720, %v807
    %v809 = vpop.f32.mrb[0].mxu0
    %810 = vdwg.mxu0
    %v811 = vadd.f32 %v805, %v460
    %v812 = vadd.f32 %v808, %v461
    %813 = vadd.xlane.f32.xlu0 %v811
    %v814 = vpop.xlane.xlu0 %813
    %815 = vadd.xlane.f32.xlu0 %v812
    %v816 = vpop.xlane.xlu0 %815
    %v817 = vmul.f32 %v814, %v425
    %v818 = vmul.f32 %v816, %v425
    %v819 = vsub.f32 %v811, %v817
    %v820 = vsub.f32 %v812, %v818
    %v821 = vmul.f32 %v819, %v819
    %v822 = vmul.f32 %v820, %v820
    %823 = vadd.xlane.f32.xlu0 %v821
    %v824 = vpop.xlane.xlu0 %823
    %825 = vadd.xlane.f32.xlu0 %v822
    %v826 = vpop.xlane.xlu0 %825
    %v827 = vmul.f32 %v824, %v425
    %v828 = vmul.f32 %v826, %v425
    %v829 = vadd.f32 %v827, 1e-05
    %v830 = vadd.f32 %v828, 1e-05
    %v831 = vrsqrt.pop %v829
    %v832 = vrsqrt.pop %v830
    %v833 = vmul.f32 %v819, %v831
    %v834 = vmul.f32 %v820, %v832
    %s835 = scalar_lea.vmem %s3, 1
    %v836 = vld [vmem:[%s835] sm:$0x1]
    %v838 = vlaneseq
    %v839 = vshrl.u32 %v838, 7
    %v840 = vsub.s32 0, %v839
    %v841 = vrot.slane %v836, %v840
    %v843 = vmul.f32 %v833, %v841
    %v844 = vmul.f32 %v834, %v841
    %s845 = scalar_lea.vmem %s4, 1
    %v846 = vld [vmem:[%s845] sm:$0x1]
    %v848 = vlaneseq
    %v849 = vshrl.u32 %v848, 7
    %v850 = vsub.s32 0, %v849
    %v851 = vrot.slane %v846, %v850
    %v853 = vadd.f32 %v843, %v851
    %v854 = vadd.f32 %v844, %v851
    %v855 = vpack.c.bf16 %v854, %v853
    %s856 = scalar_lea.vmem [#allocation5], 384
    %v857 = vld [vmem:[%s856] sm:$0xf]
    %v858 = vld [vmem:[%s856 + $0x4] sm:$0xf]
    %v859 = vld [vmem:[%s856 + $0x8] sm:$0xf]
    %v860 = vld [vmem:[%s856 + $0xc] sm:$0xf]
    %v861 = vld [vmem:[%s856 + $0x10] sm:$0xf]
    %v862 = vld [vmem:[%s856 + $0x14] sm:$0xf]
    %v863 = vld [vmem:[%s856 + $0x18] sm:$0xf]
    %v864 = vld [vmem:[%s856 + $0x1c] sm:$0xf]
    %v865 = vld [vmem:[%s856 + $0x20] sm:$0xf]
    %v866 = vld [vmem:[%s856 + $0x24] sm:$0xf]
    %v867 = vld [vmem:[%s856 + $0x28] sm:$0xf]
    %v868 = vld [vmem:[%s856 + $0x2c] sm:$0xf]
    %v869 = vld [vmem:[%s856 + $0x30] sm:$0xf]
    %v870 = vld [vmem:[%s856 + $0x34] sm:$0xf]
    %v871 = vld [vmem:[%s856 + $0x38] sm:$0xf]
    %v872 = vld [vmem:[%s856 + $0x3c] sm:$0xf]
    %s873 = scalar_lea.vmem [#allocation7], 6
    %v874 = vld [vmem:[%s873] sm:$0x1]
    %v876 = vlaneseq
    %v877 = vshrl.u32 %v876, 7
    %v878 = vsub.s32 0, %v877
    %v879 = vrot.slane %v874, %v878
    %v897 = vunpack.c.l.b16 %v857
    %v898 = vunpack.c.l.b16 %v858
    %v899 = vunpack.c.l.b16 %v859
    %v900 = vunpack.c.l.b16 %v860
    %v901 = vunpack.c.l.b16 %v861
    %v902 = vunpack.c.l.b16 %v862
    %v903 = vunpack.c.l.b16 %v863
    %v904 = vunpack.c.l.b16 %v864
    %v905 = vunpack.c.l.b16 %v865
    %v906 = vunpack.c.l.b16 %v866
    %v907 = vunpack.c.l.b16 %v867
    %v908 = vunpack.c.l.b16 %v868
    %v909 = vunpack.c.l.b16 %v869
    %v910 = vunpack.c.l.b16 %v870
    %v911 = vunpack.c.l.b16 %v871
    %v912 = vunpack.c.l.b16 %v872
    %v913 = vpack.c.b16 %v898, %v897
    %v914 = vpack.c.b16 %v900, %v899
    %v915 = vpack.c.b16 %v902, %v901
    %v916 = vpack.c.b16 %v904, %v903
    %v917 = vpack.c.b16 %v906, %v905
    %v918 = vpack.c.b16 %v908, %v907
    %v919 = vpack.c.b16 %v910, %v909
    %v920 = vpack.c.b16 %v912, %v911
    %929 = vmatprep.subr.bf16.mxu0 0
    %930 = vmatpush1.bf16.msra.mxu0 %v913
    %931 = vmatprep.subr.bf16.mxu0 0
    %932 = vmatpush1.bf16.msra.mxu0 %v914
    %933 = vmatprep.subr.bf16.mxu0 0
    %934 = vmatpush1.bf16.msra.mxu0 %v915
    %935 = vmatprep.subr.bf16.mxu0 0
    %936 = vmatpush1.bf16.msra.mxu0 %v916
    %937 = vmatprep.subr.bf16.mxu0 0
    %938 = vmatpush1.bf16.msra.mxu0 %v917
    %939 = vmatprep.subr.bf16.mxu0 0
    %940 = vmatpush1.bf16.msra.mxu0 %v918
    %941 = vmatprep.subr.bf16.mxu0 0
    %942 = vmatpush1.bf16.msra.mxu0 %v919
    %943 = vmatprep.subr.bf16.mxu0 0
    %944 = vmatpush1.bf16.msra.mxu0 %v920
    %945 = vmatprep.subr.bf16.mxu0 0
    %946 = vmatpush1.bf16.msra.mxu0 0
    %947 = vmatprep.subr.bf16.mxu0 0
    %948 = vmatpush1.bf16.msra.mxu0 0
    %949 = vmatprep.subr.bf16.mxu0 0
    %950 = vmatpush1.bf16.msra.mxu0 0
    %951 = vmatprep.subr.bf16.mxu0 0
    %952 = vmatpush1.bf16.msra.mxu0 0
    %953 = vmatprep.subr.bf16.mxu0 0
    %954 = vmatpush1.bf16.msra.mxu0 0
    %955 = vmatprep.subr.bf16.mxu0 0
    %956 = vmatpush1.bf16.msra.mxu0 0
    %957 = vmatprep.subr.bf16.mxu0 0
    %958 = vmatpush1.bf16.msra.mxu0 0
    %959 = vmatprep.subr.bf16.mxu0 0
    %960 = vmatpush1.bf16.msra.mxu0 0
    %961 = vmatprep.mubr.bf16.mxu0 0
    %962 = vmatmul.mubr.bf16.gmra.mrb[0].mxu0 %v855
    %v963 = vpop.f32.mrb[0].mxu0
    %v964 = vadd.f32 %v879, %v963
    %v965 = vpop.f32.mrb[0].mxu0
    %v966 = vpop.f32.mrb[0].mxu0
    %v967 = vadd.f32 %v879, %v966
    %v968 = vpop.f32.mrb[0].mxu0
    %969 = vdwg.mxu0
    %v970 = vmax.f32 %v964, 0.0
    %v971 = vmax.f32 %v967, 0.0
    %v972 = vpack.c.bf16 %v971, %v970
    %s973 = scalar_lea.vmem [#allocation5], 448
    %v974 = vld [vmem:[%s973] sm:$0xf]
    %v975 = vld [vmem:[%s973 + $0x4] sm:$0xf]
    %v976 = vld [vmem:[%s973 + $0x8] sm:$0xf]
    %v977 = vld [vmem:[%s973 + $0xc] sm:$0xf]
    %v978 = vld [vmem:[%s973 + $0x10] sm:$0xf]
    %v979 = vld [vmem:[%s973 + $0x14] sm:$0xf]
    %v980 = vld [vmem:[%s973 + $0x18] sm:$0xf]
    %v981 = vld [vmem:[%s973 + $0x1c] sm:$0xf]
    %v982 = vld [vmem:[%s973 + $0x20] sm:$0xf]
    %v983 = vld [vmem:[%s973 + $0x24] sm:$0xf]
    %v984 = vld [vmem:[%s973 + $0x28] sm:$0xf]
    %v985 = vld [vmem:[%s973 + $0x2c] sm:$0xf]
    %v986 = vld [vmem:[%s973 + $0x30] sm:$0xf]
    %v987 = vld [vmem:[%s973 + $0x34] sm:$0xf]
    %v988 = vld [vmem:[%s973 + $0x38] sm:$0xf]
    %v989 = vld [vmem:[%s973 + $0x3c] sm:$0xf]
    %s990 = scalar_lea.vmem [#allocation7], 7
    %v991 = vld [vmem:[%s990] sm:$0x1]
    %v993 = vlaneseq
    %v994 = vshrl.u32 %v993, 7
    %v995 = vsub.s32 0, %v994
    %v996 = vrot.slane %v991, %v995
    %v1014 = vunpack.c.l.b16 %v974
    %v1015 = vunpack.c.l.b16 %v975
    %v1016 = vunpack.c.l.b16 %v976
    %v1017 = vunpack.c.l.b16 %v977
    %v1018 = vunpack.c.l.b16 %v978
    %v1019 = vunpack.c.l.b16 %v979
    %v1020 = vunpack.c.l.b16 %v980
    %v1021 = vunpack.c.l.b16 %v981
    %v1022 = vunpack.c.l.b16 %v982
    %v1023 = vunpack.c.l.b16 %v983
    %v1024 = vunpack.c.l.b16 %v984
    %v1025 = vunpack.c.l.b16 %v985
    %v1026 = vunpack.c.l.b16 %v986
    %v1027 = vunpack.c.l.b16 %v987
    %v1028 = vunpack.c.l.b16 %v988
    %v1029 = vunpack.c.l.b16 %v989
    %v1030 = vpack.c.b16 %v1015, %v1014
    %v1031 = vpack.c.b16 %v1017, %v1016
    %v1032 = vpack.c.b16 %v1019, %v1018
    %v1033 = vpack.c.b16 %v1021, %v1020
    %v1034 = vpack.c.b16 %v1023, %v1022
    %v1035 = vpack.c.b16 %v1025, %v1024
    %v1036 = vpack.c.b16 %v1027, %v1026
    %v1037 = vpack.c.b16 %v1029, %v1028
    %1046 = vmatprep.subr.bf16.mxu0 0
    %1047 = vmatpush1.bf16.msra.mxu0 %v1030
    %1048 = vmatprep.subr.bf16.mxu0 0
    %1049 = vmatpush1.bf16.msra.mxu0 %v1031
    %1050 = vmatprep.subr.bf16.mxu0 0
    %1051 = vmatpush1.bf16.msra.mxu0 %v1032
    %1052 = vmatprep.subr.bf16.mxu0 0
    %1053 = vmatpush1.bf16.msra.mxu0 %v1033
    %1054 = vmatprep.subr.bf16.mxu0 0
    %1055 = vmatpush1.bf16.msra.mxu0 %v1034
    %1056 = vmatprep.subr.bf16.mxu0 0
    %1057 = vmatpush1.bf16.msra.mxu0 %v1035
    %1058 = vmatprep.subr.bf16.mxu0 0
    %1059 = vmatpush1.bf16.msra.mxu0 %v1036
    %1060 = vmatprep.subr.bf16.mxu0 0
    %1061 = vmatpush1.bf16.msra.mxu0 %v1037
    %1062 = vmatprep.subr.bf16.mxu0 0
    %1063 = vmatpush1.bf16.msra.mxu0 0
    %1064 = vmatprep.subr.bf16.mxu0 0
    %1065 = vmatpush1.bf16.msra.mxu0 0
    %1066 = vmatprep.subr.bf16.mxu0 0
    %1067 = vmatpush1.bf16.msra.mxu0 0
    %1068 = vmatprep.subr.bf16.mxu0 0
    %1069 = vmatpush1.bf16.msra.mxu0 0
    %1070 = vmatprep.subr.bf16.mxu0 0
    %1071 = vmatpush1.bf16.msra.mxu0 0
    %1072 = vmatprep.subr.bf16.mxu0 0
    %1073 = vmatpush1.bf16.msra.mxu0 0
    %1074 = vmatprep.subr.bf16.mxu0 0
    %1075 = vmatpush1.bf16.msra.mxu0 0
    %1076 = vmatprep.subr.bf16.mxu0 0
    %1077 = vmatpush1.bf16.msra.mxu0 0
    %1078 = vmatprep.mubr.bf16.mxu0 0
    %1079 = vmatmul.mubr.bf16.gmra.mrb[0].mxu0 %v972
    %v1080 = vpop.f32.mrb[0].mxu0
    %v1081 = vadd.f32 %v996, %v1080
    %v1082 = vpop.f32.mrb[0].mxu0
    %v1083 = vpop.f32.mrb[0].mxu0
    %v1084 = vadd.f32 %v996, %v1083
    %v1085 = vpop.f32.mrb[0].mxu0
    %1086 = vdwg.mxu0
    %v1087 = vmax.f32 %v1081, 0.0
    %v1088 = vmax.f32 %v1084, 0.0
    %v1089 = vpack.c.bf16 %v1088, %v1087
    %s1090 = scalar_lea.vmem [#allocation5], 512
    %v1091 = vld [vmem:[%s1090] sm:$0xf]
    %v1092 = vld [vmem:[%s1090 + $0x4] sm:$0xf]
    %v1093 = vld [vmem:[%s1090 + $0x8] sm:$0xf]
    %v1094 = vld [vmem:[%s1090 + $0xc] sm:$0xf]
    %v1095 = vld [vmem:[%s1090 + $0x10] sm:$0xf]
    %v1096 = vld [vmem:[%s1090 + $0x14] sm:$0xf]
    %v1097 = vld [vmem:[%s1090 + $0x18] sm:$0xf]
    %v1098 = vld [vmem:[%s1090 + $0x1c] sm:$0xf]
    %v1099 = vld [vmem:[%s1090 + $0x20] sm:$0xf]
    %v1100 = vld [vmem:[%s1090 + $0x24] sm:$0xf]
    %v1101 = vld [vmem:[%s1090 + $0x28] sm:$0xf]
    %v1102 = vld [vmem:[%s1090 + $0x2c] sm:$0xf]
    %v1103 = vld [vmem:[%s1090 + $0x30] sm:$0xf]
    %v1104 = vld [vmem:[%s1090 + $0x34] sm:$0xf]
    %v1105 = vld [vmem:[%s1090 + $0x38] sm:$0xf]
    %v1106 = vld [vmem:[%s1090 + $0x3c] sm:$0xf]
    %s1107 = scalar_lea.vmem [#allocation7], 8
    %v1108 = vld [vmem:[%s1107] sm:$0x1]
    %v1110 = vlaneseq
    %v1111 = vshrl.u32 %v1110, 7
    %v1112 = vsub.s32 0, %v1111
    %v1113 = vrot.slane %v1108, %v1112
    %v1131 = vunpack.c.l.b16 %v1091
    %v1132 = vunpack.c.l.b16 %v1092
    %v1133 = vunpack.c.l.b16 %v1093
    %v1134 = vunpack.c.l.b16 %v1094
    %v1135 = vunpack.c.l.b16 %v1095
    %v1136 = vunpack.c.l.b16 %v1096
    %v1137 = vunpack.c.l.b16 %v1097
    %v1138 = vunpack.c.l.b16 %v1098
    %v1139 = vunpack.c.l.b16 %v1099
    %v1140 = vunpack.c.l.b16 %v1100
    %v1141 = vunpack.c.l.b16 %v1101
    %v1142 = vunpack.c.l.b16 %v1102
    %v1143 = vunpack.c.l.b16 %v1103
    %v1144 = vunpack.c.l.b16 %v1104
    %v1145 = vunpack.c.l.b16 %v1105
    %v1146 = vunpack.c.l.b16 %v1106
    %v1147 = vpack.c.b16 %v1132, %v1131
    %v1148 = vpack.c.b16 %v1134, %v1133
    %v1149 = vpack.c.b16 %v1136, %v1135
    %v1150 = vpack.c.b16 %v1138, %v1137
    %v1151 = vpack.c.b16 %v1140, %v1139
    %v1152 = vpack.c.b16 %v1142, %v1141
    %v1153 = vpack.c.b16 %v1144, %v1143
    %v1154 = vpack.c.b16 %v1146, %v1145
    %1163 = vmatprep.subr.bf16.mxu0 0
    %1164 = vmatpush1.bf16.msra.mxu0 %v1147
    %1165 = vmatprep.subr.bf16.mxu0 0
    %1166 = vmatpush1.bf16.msra.mxu0 %v1148
    %1167 = vmatprep.subr.bf16.mxu0 0
    %1168 = vmatpush1.bf16.msra.mxu0 %v1149
    %1169 = vmatprep.subr.bf16.mxu0 0
    %1170 = vmatpush1.bf16.msra.mxu0 %v1150
    %1171 = vmatprep.subr.bf16.mxu0 0
    %1172 = vmatpush1.bf16.msra.mxu0 %v1151
    %1173 = vmatprep.subr.bf16.mxu0 0
    %1174 = vmatpush1.bf16.msra.mxu0 %v1152
    %1175 = vmatprep.subr.bf16.mxu0 0
    %1176 = vmatpush1.bf16.msra.mxu0 %v1153
    %1177 = vmatprep.subr.bf16.mxu0 0
    %1178 = vmatpush1.bf16.msra.mxu0 %v1154
    %1179 = vmatprep.subr.bf16.mxu0 0
    %1180 = vmatpush1.bf16.msra.mxu0 0
    %1181 = vmatprep.subr.bf16.mxu0 0
    %1182 = vmatpush1.bf16.msra.mxu0 0
    %1183 = vmatprep.subr.bf16.mxu0 0
    %1184 = vmatpush1.bf16.msra.mxu0 0
    %1185 = vmatprep.subr.bf16.mxu0 0
    %1186 = vmatpush1.bf16.msra.mxu0 0
    %1187 = vmatprep.subr.bf16.mxu0 0
    %1188 = vmatpush1.bf16.msra.mxu0 0
    %1189 = vmatprep.subr.bf16.mxu0 0
    %1190 = vmatpush1.bf16.msra.mxu0 0
    %1191 = vmatprep.subr.bf16.mxu0 0
    %1192 = vmatpush1.bf16.msra.mxu0 0
    %1193 = vmatprep.subr.bf16.mxu0 0
    %1194 = vmatpush1.bf16.msra.mxu0 0
    %1195 = vmatprep.mubr.bf16.mxu0 0
    %1196 = vmatmul.mubr.bf16.gmra.mrb[0].mxu0 %v1089
    %v1197 = vpop.f32.mrb[0].mxu0
    %v1198 = vadd.f32 %v1113, %v1197
    %v1199 = vpop.f32.mrb[0].mxu0
    %v1200 = vpop.f32.mrb[0].mxu0
    %v1201 = vadd.f32 %v1113, %v1200
    %v1202 = vpop.f32.mrb[0].mxu0
    %1203 = vdwg.mxu0
    %v1204 = vadd.f32 %v1198, %v853
    %v1205 = vadd.f32 %v1201, %v854
    %1206 = vadd.xlane.f32.xlu0 %v1204
    %v1207 = vpop.xlane.xlu0 %1206
    %1208 = vadd.xlane.f32.xlu0 %v1205
    %v1209 = vpop.xlane.xlu0 %1208
    %v1210 = vmul.f32 %v1207, %v425
    %v1211 = vmul.f32 %v1209, %v425
    %v1212 = vsub.f32 %v1204, %v1210
    %v1213 = vsub.f32 %v1205, %v1211
    %v1214 = vmul.f32 %v1212, %v1212
    %v1215 = vmul.f32 %v1213, %v1213
    %1216 = vadd.xlane.f32.xlu0 %v1214
    %v1217 = vpop.xlane.xlu0 %1216
    %1218 = vadd.xlane.f32.xlu0 %v1215
    %v1219 = vpop.xlane.xlu0 %1218
    %v1220 = vmul.f32 %v1217, %v425
    %v1221 = vmul.f32 %v1219, %v425
    %v1222 = vadd.f32 %v1220, 1e-05
    %v1223 = vadd.f32 %v1221, 1e-05
    %v1224 = vrsqrt.pop %v1222
    %v1225 = vrsqrt.pop %v1223
    %v1226 = vmul.f32 %v1212, %v1224
    %v1227 = vmul.f32 %v1213, %v1225
    %s1228 = scalar_lea.vmem %s3, 2
    %v1229 = vld [vmem:[%s1228] sm:$0x1]
    %v1231 = vlaneseq
    %v1232 = vshrl.u32 %v1231, 7
    %v1233 = vsub.s32 0, %v1232
    %v1234 = vrot.slane %v1229, %v1233
    %v1236 = vmul.f32 %v1226, %v1234
    %v1237 = vmul.f32 %v1227, %v1234
    %s1238 = scalar_lea.vmem %s4, 2
    %v1239 = vld [vmem:[%s1238] sm:$0x1]
    %v1241 = vlaneseq
    %v1242 = vshrl.u32 %v1241, 7
    %v1243 = vsub.s32 0, %v1242
    %v1244 = vrot.slane %v1239, %v1243
    %v1246 = vadd.f32 %v1236, %v1244
    %v1247 = vadd.f32 %v1237, %v1244
    %v1248 = vpack.c.bf16 %v1247, %v1246
    %s1249 = scalar_lea.vmem [#allocation5], 576
    %v1250 = vld [vmem:[%s1249] sm:$0xf]
    %v1251 = vld [vmem:[%s1249 + $0x4] sm:$0xf]
    %v1252 = vld [vmem:[%s1249 + $0x8] sm:$0xf]
    %v1253 = vld [vmem:[%s1249 + $0xc] sm:$0xf]
    %v1254 = vld [vmem:[%s1249 + $0x10] sm:$0xf]
    %v1255 = vld [vmem:[%s1249 + $0x14] sm:$0xf]
    %v1256 = vld [vmem:[%s1249 + $0x18] sm:$0xf]
    %v1257 = vld [vmem:[%s1249 + $0x1c] sm:$0xf]
    %v1258 = vld [vmem:[%s1249 + $0x20] sm:$0xf]
    %v1259 = vld [vmem:[%s1249 + $0x24] sm:$0xf]
    %v1260 = vld [vmem:[%s1249 + $0x28] sm:$0xf]
    %v1261 = vld [vmem:[%s1249 + $0x2c] sm:$0xf]
    %v1262 = vld [vmem:[%s1249 + $0x30] sm:$0xf]
    %v1263 = vld [vmem:[%s1249 + $0x34] sm:$0xf]
    %v1264 = vld [vmem:[%s1249 + $0x38] sm:$0xf]
    %v1265 = vld [vmem:[%s1249 + $0x3c] sm:$0xf]
    %s1266 = scalar_lea.vmem [#allocation7], 9
    %v1267 = vld [vmem:[%s1266] sm:$0x1]
    %v1269 = vlaneseq
    %v1270 = vshrl.u32 %v1269, 7
    %v1271 = vsub.s32 0, %v1270
    %v1272 = vrot.slane %v1267, %v1271
    %v1290 = vunpack.c.l.b16 %v1250
    %v1291 = vunpack.c.l.b16 %v1251
    %v1292 = vunpack.c.l.b16 %v1252
    %v1293 = vunpack.c.l.b16 %v1253
    %v1294 = vunpack.c.l.b16 %v1254
    %v1295 = vunpack.c.l.b16 %v1255
    %v1296 = vunpack.c.l.b16 %v1256
    %v1297 = vunpack.c.l.b16 %v1257
    %v1298 = vunpack.c.l.b16 %v1258
    %v1299 = vunpack.c.l.b16 %v1259
    %v1300 = vunpack.c.l.b16 %v1260
    %v1301 = vunpack.c.l.b16 %v1261
    %v1302 = vunpack.c.l.b16 %v1262
    %v1303 = vunpack.c.l.b16 %v1263
    %v1304 = vunpack.c.l.b16 %v1264
    %v1305 = vunpack.c.l.b16 %v1265
    %v1306 = vpack.c.b16 %v1291, %v1290
    %v1307 = vpack.c.b16 %v1293, %v1292
    %v1308 = vpack.c.b16 %v1295, %v1294
    %v1309 = vpack.c.b16 %v1297, %v1296
    %v1310 = vpack.c.b16 %v1299, %v1298
    %v1311 = vpack.c.b16 %v1301, %v1300
    %v1312 = vpack.c.b16 %v1303, %v1302
    %v1313 = vpack.c.b16 %v1305, %v1304
    %1322 = vmatprep.subr.bf16.mxu0 0
    %1323 = vmatpush1.bf16.msra.mxu0 %v1306
    %1324 = vmatprep.subr.bf16.mxu0 0
    %1325 = vmatpush1.bf16.msra.mxu0 %v1307
    %1326 = vmatprep.subr.bf16.mxu0 0
    %1327 = vmatpush1.bf16.msra.mxu0 %v1308
    %1328 = vmatprep.subr.bf16.mxu0 0
    %1329 = vmatpush1.bf16.msra.mxu0 %v1309
    %1330 = vmatprep.subr.bf16.mxu0 0
    %1331 = vmatpush1.bf16.msra.mxu0 %v1310
    %1332 = vmatprep.subr.bf16.mxu0 0
    %1333 = vmatpush1.bf16.msra.mxu0 %v1311
    %1334 = vmatprep.subr.bf16.mxu0 0
    %1335 = vmatpush1.bf16.msra.mxu0 %v1312
    %1336 = vmatprep.subr.bf16.mxu0 0
    %1337 = vmatpush1.bf16.msra.mxu0 %v1313
    %1338 = vmatprep.subr.bf16.mxu0 0
    %1339 = vmatpush1.bf16.msra.mxu0 0
    %1340 = vmatprep.subr.bf16.mxu0 0
    %1341 = vmatpush1.bf16.msra.mxu0 0
    %1342 = vmatprep.subr.bf16.mxu0 0
    %1343 = vmatpush1.bf16.msra.mxu0 0
    %1344 = vmatprep.subr.bf16.mxu0 0
    %1345 = vmatpush1.bf16.msra.mxu0 0
    %1346 = vmatprep.subr.bf16.mxu0 0
    %1347 = vmatpush1.bf16.msra.mxu0 0
    %1348 = vmatprep.subr.bf16.mxu0 0
    %1349 = vmatpush1.bf16.msra.mxu0 0
    %1350 = vmatprep.subr.bf16.mxu0 0
    %1351 = vmatpush1.bf16.msra.mxu0 0
    %1352 = vmatprep.subr.bf16.mxu0 0
    %1353 = vmatpush1.bf16.msra.mxu0 0
    %1354 = vmatprep.mubr.bf16.mxu0 0
    %1355 = vmatmul.mubr.bf16.gmra.mrb[0].mxu0 %v1248
    %v1356 = vpop.f32.mrb[0].mxu0
    %v1357 = vadd.f32 %v1272, %v1356
    %v1358 = vpop.f32.mrb[0].mxu0
    %v1359 = vpop.f32.mrb[0].mxu0
    %v1360 = vadd.f32 %v1272, %v1359
    %v1361 = vpop.f32.mrb[0].mxu0
    %1362 = vdwg.mxu0
    %v1363 = vmax.f32 %v1357, 0.0
    %v1364 = vmax.f32 %v1360, 0.0
    %v1365 = vpack.c.bf16 %v1364, %v1363
    %s1366 = scalar_lea.vmem [#allocation5], 640
    %v1367 = vld [vmem:[%s1366] sm:$0xf]
    %v1368 = vld [vmem:[%s1366 + $0x4] sm:$0xf]
    %v1369 = vld [vmem:[%s1366 + $0x8] sm:$0xf]
    %v1370 = vld [vmem:[%s1366 + $0xc] sm:$0xf]
    %v1371 = vld [vmem:[%s1366 + $0x10] sm:$0xf]
    %v1372 = vld [vmem:[%s1366 + $0x14] sm:$0xf]
    %v1373 = vld [vmem:[%s1366 + $0x18] sm:$0xf]
    %v1374 = vld [vmem:[%s1366 + $0x1c] sm:$0xf]
    %v1375 = vld [vmem:[%s1366 + $0x20] sm:$0xf]
    %v1376 = vld [vmem:[%s1366 + $0x24] sm:$0xf]
    %v1377 = vld [vmem:[%s1366 + $0x28] sm:$0xf]
    %v1378 = vld [vmem:[%s1366 + $0x2c] sm:$0xf]
    %v1379 = vld [vmem:[%s1366 + $0x30] sm:$0xf]
    %v1380 = vld [vmem:[%s1366 + $0x34] sm:$0xf]
    %v1381 = vld [vmem:[%s1366 + $0x38] sm:$0xf]
    %v1382 = vld [vmem:[%s1366 + $0x3c] sm:$0xf]
    %s1383 = scalar_lea.vmem [#allocation7], 10
    %v1384 = vld [vmem:[%s1383] sm:$0x1]
    %v1386 = vlaneseq
    %v1387 = vshrl.u32 %v1386, 7
    %v1388 = vsub.s32 0, %v1387
    %v1389 = vrot.slane %v1384, %v1388
    %v1407 = vunpack.c.l.b16 %v1367
    %v1408 = vunpack.c.l.b16 %v1368
    %v1409 = vunpack.c.l.b16 %v1369
    %v1410 = vunpack.c.l.b16 %v1370
    %v1411 = vunpack.c.l.b16 %v1371
    %v1412 = vunpack.c.l.b16 %v1372
    %v1413 = vunpack.c.l.b16 %v1373
    %v1414 = vunpack.c.l.b16 %v1374
    %v1415 = vunpack.c.l.b16 %v1375
    %v1416 = vunpack.c.l.b16 %v1376
    %v1417 = vunpack.c.l.b16 %v1377
    %v1418 = vunpack.c.l.b16 %v1378
    %v1419 = vunpack.c.l.b16 %v1379
    %v1420 = vunpack.c.l.b16 %v1380
    %v1421 = vunpack.c.l.b16 %v1381
    %v1422 = vunpack.c.l.b16 %v1382
    %v1423 = vpack.c.b16 %v1408, %v1407
    %v1424 = vpack.c.b16 %v1410, %v1409
    %v1425 = vpack.c.b16 %v1412, %v1411
    %v1426 = vpack.c.b16 %v1414, %v1413
    %v1427 = vpack.c.b16 %v1416, %v1415
    %v1428 = vpack.c.b16 %v1418, %v1417
    %v1429 = vpack.c.b16 %v1420, %v1419
    %v1430 = vpack.c.b16 %v1422, %v1421
    %1439 = vmatprep.subr.bf16.mxu0 0
    %1440 = vmatpush1.bf16.msra.mxu0 %v1423
    %1441 = vmatprep.subr.bf16.mxu0 0
    %1442 = vmatpush1.bf16.msra.mxu0 %v1424
    %1443 = vmatprep.subr.bf16.mxu0 0
    %1444 = vmatpush1.bf16.msra.mxu0 %v1425
    %1445 = vmatprep.subr.bf16.mxu0 0
    %1446 = vmatpush1.bf16.msra.mxu0 %v1426
    %1447 = vmatprep.subr.bf16.mxu0 0
    %1448 = vmatpush1.bf16.msra.mxu0 %v1427
    %1449 = vmatprep.subr.bf16.mxu0 0
    %1450 = vmatpush1.bf16.msra.mxu0 %v1428
    %1451 = vmatprep.subr.bf16.mxu0 0
    %1452 = vmatpush1.bf16.msra.mxu0 %v1429
    %1453 = vmatprep.subr.bf16.mxu0 0
    %1454 = vmatpush1.bf16.msra.mxu0 %v1430
    %1455 = vmatprep.subr.bf16.mxu0 0
    %1456 = vmatpush1.bf16.msra.mxu0 0
    %1457 = vmatprep.subr.bf16.mxu0 0
    %1458 = vmatpush1.bf16.msra.mxu0 0
    %1459 = vmatprep.subr.bf16.mxu0 0
    %1460 = vmatpush1.bf16.msra.mxu0 0
    %1461 = vmatprep.subr.bf16.mxu0 0
    %1462 = vmatpush1.bf16.msra.mxu0 0
    %1463 = vmatprep.subr.bf16.mxu0 0
    %1464 = vmatpush1.bf16.msra.mxu0 0
    %1465 = vmatprep.subr.bf16.mxu0 0
    %1466 = vmatpush1.bf16.msra.mxu0 0
    %1467 = vmatprep.subr.bf16.mxu0 0
    %1468 = vmatpush1.bf16.msra.mxu0 0
    %1469 = vmatprep.subr.bf16.mxu0 0
    %1470 = vmatpush1.bf16.msra.mxu0 0
    %1471 = vmatprep.mubr.bf16.mxu0 0
    %1472 = vmatmul.mubr.bf16.gmra.mrb[0].mxu0 %v1365
    %v1473 = vpop.f32.mrb[0].mxu0
    %v1474 = vadd.f32 %v1389, %v1473
    %v1475 = vpop.f32.mrb[0].mxu0
    %v1476 = vpop.f32.mrb[0].mxu0
    %v1477 = vadd.f32 %v1389, %v1476
    %v1478 = vpop.f32.mrb[0].mxu0
    %1479 = vdwg.mxu0
    %v1480 = vmax.f32 %v1474, 0.0
    %v1481 = vmax.f32 %v1477, 0.0
    %v1482 = vpack.c.bf16 %v1481, %v1480
    %s1483 = scalar_lea.vmem [#allocation5], 704
    %v1484 = vld [vmem:[%s1483] sm:$0xf]
    %v1485 = vld [vmem:[%s1483 + $0x4] sm:$0xf]
    %v1486 = vld [vmem:[%s1483 + $0x8] sm:$0xf]
    %v1487 = vld [vmem:[%s1483 + $0xc] sm:$0xf]
    %v1488 = vld [vmem:[%s1483 + $0x10] sm:$0xf]
    %v1489 = vld [vmem:[%s1483 + $0x14] sm:$0xf]
    %v1490 = vld [vmem:[%s1483 + $0x18] sm:$0xf]
    %v1491 = vld [vmem:[%s1483 + $0x1c] sm:$0xf]
    %v1492 = vld [vmem:[%s1483 + $0x20] sm:$0xf]
    %v1493 = vld [vmem:[%s1483 + $0x24] sm:$0xf]
    %v1494 = vld [vmem:[%s1483 + $0x28] sm:$0xf]
    %v1495 = vld [vmem:[%s1483 + $0x2c] sm:$0xf]
    %v1496 = vld [vmem:[%s1483 + $0x30] sm:$0xf]
    %v1497 = vld [vmem:[%s1483 + $0x34] sm:$0xf]
    %v1498 = vld [vmem:[%s1483 + $0x38] sm:$0xf]
    %v1499 = vld [vmem:[%s1483 + $0x3c] sm:$0xf]
    %s1500 = scalar_lea.vmem [#allocation7], 11
    %v1501 = vld [vmem:[%s1500] sm:$0x1]
    %v1503 = vlaneseq
    %v1504 = vshrl.u32 %v1503, 7
    %v1505 = vsub.s32 0, %v1504
    %v1506 = vrot.slane %v1501, %v1505
    %v1524 = vunpack.c.l.b16 %v1484
    %v1525 = vunpack.c.l.b16 %v1485
    %v1526 = vunpack.c.l.b16 %v1486
    %v1527 = vunpack.c.l.b16 %v1487
    %v1528 = vunpack.c.l.b16 %v1488
    %v1529 = vunpack.c.l.b16 %v1489
    %v1530 = vunpack.c.l.b16 %v1490
    %v1531 = vunpack.c.l.b16 %v1491
    %v1532 = vunpack.c.l.b16 %v1492
    %v1533 = vunpack.c.l.b16 %v1493
    %v1534 = vunpack.c.l.b16 %v1494
    %v1535 = vunpack.c.l.b16 %v1495
    %v1536 = vunpack.c.l.b16 %v1496
    %v1537 = vunpack.c.l.b16 %v1497
    %v1538 = vunpack.c.l.b16 %v1498
    %v1539 = vunpack.c.l.b16 %v1499
    %v1540 = vpack.c.b16 %v1525, %v1524
    %v1541 = vpack.c.b16 %v1527, %v1526
    %v1542 = vpack.c.b16 %v1529, %v1528
    %v1543 = vpack.c.b16 %v1531, %v1530
    %v1544 = vpack.c.b16 %v1533, %v1532
    %v1545 = vpack.c.b16 %v1535, %v1534
    %v1546 = vpack.c.b16 %v1537, %v1536
    %v1547 = vpack.c.b16 %v1539, %v1538
    %1556 = vmatprep.subr.bf16.mxu0 0
    %1557 = vmatpush1.bf16.msra.mxu0 %v1540
    %1558 = vmatprep.subr.bf16.mxu0 0
    %1559 = vmatpush1.bf16.msra.mxu0 %v1541
    %1560 = vmatprep.subr.bf16.mxu0 0
    %1561 = vmatpush1.bf16.msra.mxu0 %v1542
    %1562 = vmatprep.subr.bf16.mxu0 0
    %1563 = vmatpush1.bf16.msra.mxu0 %v1543
    %1564 = vmatprep.subr.bf16.mxu0 0
    %1565 = vmatpush1.bf16.msra.mxu0 %v1544
    %1566 = vmatprep.subr.bf16.mxu0 0
    %1567 = vmatpush1.bf16.msra.mxu0 %v1545
    %1568 = vmatprep.subr.bf16.mxu0 0
    %1569 = vmatpush1.bf16.msra.mxu0 %v1546
    %1570 = vmatprep.subr.bf16.mxu0 0
    %1571 = vmatpush1.bf16.msra.mxu0 %v1547
    %1572 = vmatprep.subr.bf16.mxu0 0
    %1573 = vmatpush1.bf16.msra.mxu0 0
    %1574 = vmatprep.subr.bf16.mxu0 0
    %1575 = vmatpush1.bf16.msra.mxu0 0
    %1576 = vmatprep.subr.bf16.mxu0 0
    %1577 = vmatpush1.bf16.msra.mxu0 0
    %1578 = vmatprep.subr.bf16.mxu0 0
    %1579 = vmatpush1.bf16.msra.mxu0 0
    %1580 = vmatprep.subr.bf16.mxu0 0
    %1581 = vmatpush1.bf16.msra.mxu0 0
    %1582 = vmatprep.subr.bf16.mxu0 0
    %1583 = vmatpush1.bf16.msra.mxu0 0
    %1584 = vmatprep.subr.bf16.mxu0 0
    %1585 = vmatpush1.bf16.msra.mxu0 0
    %1586 = vmatprep.subr.bf16.mxu0 0
    %1587 = vmatpush1.bf16.msra.mxu0 0
    %1588 = vmatprep.mubr.bf16.mxu0 0
    %1589 = vmatmul.mubr.bf16.gmra.mrb[0].mxu0 %v1482
    %v1590 = vpop.f32.mrb[0].mxu0
    %v1591 = vadd.f32 %v1506, %v1590
    %v1592 = vpop.f32.mrb[0].mxu0
    %v1593 = vpop.f32.mrb[0].mxu0
    %v1594 = vadd.f32 %v1506, %v1593
    %v1595 = vpop.f32.mrb[0].mxu0
    %1596 = vdwg.mxu0
    %v1597 = vadd.f32 %v1591, %v1246
    %v1598 = vadd.f32 %v1594, %v1247
    %1599 = vadd.xlane.f32.xlu0 %v1597
    %v1600 = vpop.xlane.xlu0 %1599
    %1601 = vadd.xlane.f32.xlu0 %v1598
    %v1602 = vpop.xlane.xlu0 %1601
    %v1603 = vmul.f32 %v1600, %v425
    %v1604 = vmul.f32 %v1602, %v425
    %v1605 = vsub.f32 %v1597, %v1603
    %v1606 = vsub.f32 %v1598, %v1604
    %v1607 = vmul.f32 %v1605, %v1605
    %v1608 = vmul.f32 %v1606, %v1606
    %1609 = vadd.xlane.f32.xlu0 %v1607
    %v1610 = vpop.xlane.xlu0 %1609
    %1611 = vadd.xlane.f32.xlu0 %v1608
    %v1612 = vpop.xlane.xlu0 %1611
    %v1613 = vmul.f32 %v1610, %v425
    %v1614 = vmul.f32 %v1612, %v425
    %v1615 = vadd.f32 %v1613, 1e-05
    %v1616 = vadd.f32 %v1614, 1e-05
    %v1617 = vrsqrt.pop %v1615
    %v1618 = vrsqrt.pop %v1616
    %v1619 = vmul.f32 %v1605, %v1617
    %v1620 = vmul.f32 %v1606, %v1618
    %s1621 = scalar_lea.vmem %s3, 3
    %v1622 = vld [vmem:[%s1621] sm:$0x1]
    %v1624 = vlaneseq
    %v1625 = vshrl.u32 %v1624, 7
    %v1626 = vsub.s32 0, %v1625
    %v1627 = vrot.slane %v1622, %v1626
    %v1629 = vmul.f32 %v1619, %v1627
    %v1630 = vmul.f32 %v1620, %v1627
    %s1631 = scalar_lea.vmem %s4, 3
    %v1632 = vld [vmem:[%s1631] sm:$0x1]
    %v1634 = vlaneseq
    %v1635 = vshrl.u32 %v1634, 7
    %v1636 = vsub.s32 0, %v1635
    %v1637 = vrot.slane %v1632, %v1636
    %v1639 = vadd.f32 %v1629, %v1637
    %v1640 = vadd.f32 %v1630, %v1637
    %v1641 = vpack.c.bf16 %v1640, %v1639
    %s1642 = scalar_lea.vmem [#allocation5], 768
    %v1643 = vld [vmem:[%s1642] sm:$0xf]
    %v1644 = vld [vmem:[%s1642 + $0x4] sm:$0xf]
    %v1645 = vld [vmem:[%s1642 + $0x8] sm:$0xf]
    %v1646 = vld [vmem:[%s1642 + $0xc] sm:$0xf]
    %v1647 = vld [vmem:[%s1642 + $0x10] sm:$0xf]
    %v1648 = vld [vmem:[%s1642 + $0x14] sm:$0xf]
    %v1649 = vld [vmem:[%s1642 + $0x18] sm:$0xf]
    %v1650 = vld [vmem:[%s1642 + $0x1c] sm:$0xf]
    %v1651 = vld [vmem:[%s1642 + $0x20] sm:$0xf]
    %v1652 = vld [vmem:[%s1642 + $0x24] sm:$0xf]
    %v1653 = vld [vmem:[%s1642 + $0x28] sm:$0xf]
    %v1654 = vld [vmem:[%s1642 + $0x2c] sm:$0xf]
    %v1655 = vld [vmem:[%s1642 + $0x30] sm:$0xf]
    %v1656 = vld [vmem:[%s1642 + $0x34] sm:$0xf]
    %v1657 = vld [vmem:[%s1642 + $0x38] sm:$0xf]
    %v1658 = vld [vmem:[%s1642 + $0x3c] sm:$0xf]
    %s1659 = scalar_lea.vmem [#allocation7], 12
    %v1660 = vld [vmem:[%s1659] sm:$0x1]
    %v1662 = vlaneseq
    %v1663 = vshrl.u32 %v1662, 7
    %v1664 = vsub.s32 0, %v1663
    %v1665 = vrot.slane %v1660, %v1664
    %v1683 = vunpack.c.l.b16 %v1643
    %v1684 = vunpack.c.l.b16 %v1644
    %v1685 = vunpack.c.l.b16 %v1645
    %v1686 = vunpack.c.l.b16 %v1646
    %v1687 = vunpack.c.l.b16 %v1647
    %v1688 = vunpack.c.l.b16 %v1648
    %v1689 = vunpack.c.l.b16 %v1649
    %v1690 = vunpack.c.l.b16 %v1650
    %v1691 = vunpack.c.l.b16 %v1651
    %v1692 = vunpack.c.l.b16 %v1652
    %v1693 = vunpack.c.l.b16 %v1653
    %v1694 = vunpack.c.l.b16 %v1654
    %v1695 = vunpack.c.l.b16 %v1655
    %v1696 = vunpack.c.l.b16 %v1656
    %v1697 = vunpack.c.l.b16 %v1657
    %v1698 = vunpack.c.l.b16 %v1658
    %v1699 = vpack.c.b16 %v1684, %v1683
    %v1700 = vpack.c.b16 %v1686, %v1685
    %v1701 = vpack.c.b16 %v1688, %v1687
    %v1702 = vpack.c.b16 %v1690, %v1689
    %v1703 = vpack.c.b16 %v1692, %v1691
    %v1704 = vpack.c.b16 %v1694, %v1693
    %v1705 = vpack.c.b16 %v1696, %v1695
    %v1706 = vpack.c.b16 %v1698, %v1697
    %1715 = vmatprep.subr.bf16.mxu0 0
    %1716 = vmatpush1.bf16.msra.mxu0 %v1699
    %1717 = vmatprep.subr.bf16.mxu0 0
    %1718 = vmatpush1.bf16.msra.mxu0 %v1700
    %1719 = vmatprep.subr.bf16.mxu0 0
    %1720 = vmatpush1.bf16.msra.mxu0 %v1701
    %1721 = vmatprep.subr.bf16.mxu0 0
    %1722 = vmatpush1.bf16.msra.mxu0 %v1702
    %1723 = vmatprep.subr.bf16.mxu0 0
    %1724 = vmatpush1.bf16.msra.mxu0 %v1703
    %1725 = vmatprep.subr.bf16.mxu0 0
    %1726 = vmatpush1.bf16.msra.mxu0 %v1704
    %1727 = vmatprep.subr.bf16.mxu0 0
    %1728 = vmatpush1.bf16.msra.mxu0 %v1705
    %1729 = vmatprep.subr.bf16.mxu0 0
    %1730 = vmatpush1.bf16.msra.mxu0 %v1706
    %1731 = vmatprep.subr.bf16.mxu0 0
    %1732 = vmatpush1.bf16.msra.mxu0 0
    %1733 = vmatprep.subr.bf16.mxu0 0
    %1734 = vmatpush1.bf16.msra.mxu0 0
    %1735 = vmatprep.subr.bf16.mxu0 0
    %1736 = vmatpush1.bf16.msra.mxu0 0
    %1737 = vmatprep.subr.bf16.mxu0 0
    %1738 = vmatpush1.bf16.msra.mxu0 0
    %1739 = vmatprep.subr.bf16.mxu0 0
    %1740 = vmatpush1.bf16.msra.mxu0 0
    %1741 = vmatprep.subr.bf16.mxu0 0
    %1742 = vmatpush1.bf16.msra.mxu0 0
    %1743 = vmatprep.subr.bf16.mxu0 0
    %1744 = vmatpush1.bf16.msra.mxu0 0
    %1745 = vmatprep.subr.bf16.mxu0 0
    %1746 = vmatpush1.bf16.msra.mxu0 0
    %1747 = vmatprep.mubr.bf16.mxu0 0
    %1748 = vmatmul.mubr.bf16.gmra.mrb[0].mxu0 %v1641
    %v1749 = vpop.f32.mrb[0].mxu0
    %v1750 = vadd.f32 %v1665, %v1749
    %v1751 = vpop.f32.mrb[0].mxu0
    %v1752 = vpop.f32.mrb[0].mxu0
    %v1753 = vadd.f32 %v1665, %v1752
    %v1754 = vpop.f32.mrb[0].mxu0
    %1755 = vdwg.mxu0
    %v1756 = vmax.f32 %v1750, 0.0
    %v1757 = vmax.f32 %v1753, 0.0
    %v1758 = vpack.c.bf16 %v1757, %v1756
    %s1759 = scalar_lea.vmem [#allocation5], 832
    %v1760 = vld [vmem:[%s1759] sm:$0xf]
    %v1761 = vld [vmem:[%s1759 + $0x4] sm:$0xf]
    %v1762 = vld [vmem:[%s1759 + $0x8] sm:$0xf]
    %v1763 = vld [vmem:[%s1759 + $0xc] sm:$0xf]
    %v1764 = vld [vmem:[%s1759 + $0x10] sm:$0xf]
    %v1765 = vld [vmem:[%s1759 + $0x14] sm:$0xf]
    %v1766 = vld [vmem:[%s1759 + $0x18] sm:$0xf]
    %v1767 = vld [vmem:[%s1759 + $0x1c] sm:$0xf]
    %v1768 = vld [vmem:[%s1759 + $0x20] sm:$0xf]
    %v1769 = vld [vmem:[%s1759 + $0x24] sm:$0xf]
    %v1770 = vld [vmem:[%s1759 + $0x28] sm:$0xf]
    %v1771 = vld [vmem:[%s1759 + $0x2c] sm:$0xf]
    %v1772 = vld [vmem:[%s1759 + $0x30] sm:$0xf]
    %v1773 = vld [vmem:[%s1759 + $0x34] sm:$0xf]
    %v1774 = vld [vmem:[%s1759 + $0x38] sm:$0xf]
    %v1775 = vld [vmem:[%s1759 + $0x3c] sm:$0xf]
    %s1776 = scalar_lea.vmem [#allocation7], 13
    %v1777 = vld [vmem:[%s1776] sm:$0x1]
    %v1779 = vlaneseq
    %v1780 = vshrl.u32 %v1779, 7
    %v1781 = vsub.s32 0, %v1780
    %v1782 = vrot.slane %v1777, %v1781
    %v1800 = vunpack.c.l.b16 %v1760
    %v1801 = vunpack.c.l.b16 %v1761
    %v1802 = vunpack.c.l.b16 %v1762
    %v1803 = vunpack.c.l.b16 %v1763
    %v1804 = vunpack.c.l.b16 %v1764
    %v1805 = vunpack.c.l.b16 %v1765
    %v1806 = vunpack.c.l.b16 %v1766
    %v1807 = vunpack.c.l.b16 %v1767
    %v1808 = vunpack.c.l.b16 %v1768
    %v1809 = vunpack.c.l.b16 %v1769
    %v1810 = vunpack.c.l.b16 %v1770
    %v1811 = vunpack.c.l.b16 %v1771
    %v1812 = vunpack.c.l.b16 %v1772
    %v1813 = vunpack.c.l.b16 %v1773
    %v1814 = vunpack.c.l.b16 %v1774
    %v1815 = vunpack.c.l.b16 %v1775
    %v1816 = vpack.c.b16 %v1801, %v1800
    %v1817 = vpack.c.b16 %v1803, %v1802
    %v1818 = vpack.c.b16 %v1805, %v1804
    %v1819 = vpack.c.b16 %v1807, %v1806
    %v1820 = vpack.c.b16 %v1809, %v1808
    %v1821 = vpack.c.b16 %v1811, %v1810
    %v1822 = vpack.c.b16 %v1813, %v1812
    %v1823 = vpack.c.b16 %v1815, %v1814
    %1832 = vmatprep.subr.bf16.mxu0 0
    %1833 = vmatpush1.bf16.msra.mxu0 %v1816
    %1834 = vmatprep.subr.bf16.mxu0 0
    %1835 = vmatpush1.bf16.msra.mxu0 %v1817
    %1836 = vmatprep.subr.bf16.mxu0 0
    %1837 = vmatpush1.bf16.msra.mxu0 %v1818
    %1838 = vmatprep.subr.bf16.mxu0 0
    %1839 = vmatpush1.bf16.msra.mxu0 %v1819
    %1840 = vmatprep.subr.bf16.mxu0 0
    %1841 = vmatpush1.bf16.msra.mxu0 %v1820
    %1842 = vmatprep.subr.bf16.mxu0 0
    %1843 = vmatpush1.bf16.msra.mxu0 %v1821
    %1844 = vmatprep.subr.bf16.mxu0 0
    %1845 = vmatpush1.bf16.msra.mxu0 %v1822
    %1846 = vmatprep.subr.bf16.mxu0 0
    %1847 = vmatpush1.bf16.msra.mxu0 %v1823
    %1848 = vmatprep.subr.bf16.mxu0 0
    %1849 = vmatpush1.bf16.msra.mxu0 0
    %1850 = vmatprep.subr.bf16.mxu0 0
    %1851 = vmatpush1.bf16.msra.mxu0 0
    %1852 = vmatprep.subr.bf16.mxu0 0
    %1853 = vmatpush1.bf16.msra.mxu0 0
    %1854 = vmatprep.subr.bf16.mxu0 0
    %1855 = vmatpush1.bf16.msra.mxu0 0
    %1856 = vmatprep.subr.bf16.mxu0 0
    %1857 = vmatpush1.bf16.msra.mxu0 0
    %1858 = vmatprep.subr.bf16.mxu0 0
    %1859 = vmatpush1.bf16.msra.mxu0 0
    %1860 = vmatprep.subr.bf16.mxu0 0
    %1861 = vmatpush1.bf16.msra.mxu0 0
    %1862 = vmatprep.subr.bf16.mxu0 0
    %1863 = vmatpush1.bf16.msra.mxu0 0
    %1864 = vmatprep.mubr.bf16.mxu0 0
    %1865 = vmatmul.mubr.bf16.gmra.mrb[0].mxu0 %v1758
    %v1866 = vpop.f32.mrb[0].mxu0
    %v1867 = vadd.f32 %v1782, %v1866
    %v1868 = vpop.f32.mrb[0].mxu0
    %v1869 = vpop.f32.mrb[0].mxu0
    %v1870 = vadd.f32 %v1782, %v1869
    %v1871 = vpop.f32.mrb[0].mxu0
    %1872 = vdwg.mxu0
    %v1873 = vmax.f32 %v1867, 0.0
    %v1874 = vmax.f32 %v1870, 0.0
    %v1875 = vpack.c.bf16 %v1874, %v1873
    %s1876 = scalar_lea.vmem [#allocation5], 896
    %v1877 = vld [vmem:[%s1876] sm:$0xf]
    %v1878 = vld [vmem:[%s1876 + $0x4] sm:$0xf]
    %v1879 = vld [vmem:[%s1876 + $0x8] sm:$0xf]
    %v1880 = vld [vmem:[%s1876 + $0xc] sm:$0xf]
    %v1881 = vld [vmem:[%s1876 + $0x10] sm:$0xf]
    %v1882 = vld [vmem:[%s1876 + $0x14] sm:$0xf]
    %v1883 = vld [vmem:[%s1876 + $0x18] sm:$0xf]
    %v1884 = vld [vmem:[%s1876 + $0x1c] sm:$0xf]
    %v1885 = vld [vmem:[%s1876 + $0x20] sm:$0xf]
    %v1886 = vld [vmem:[%s1876 + $0x24] sm:$0xf]
    %v1887 = vld [vmem:[%s1876 + $0x28] sm:$0xf]
    %v1888 = vld [vmem:[%s1876 + $0x2c] sm:$0xf]
    %v1889 = vld [vmem:[%s1876 + $0x30] sm:$0xf]
    %v1890 = vld [vmem:[%s1876 + $0x34] sm:$0xf]
    %v1891 = vld [vmem:[%s1876 + $0x38] sm:$0xf]
    %v1892 = vld [vmem:[%s1876 + $0x3c] sm:$0xf]
    %s1893 = scalar_lea.vmem [#allocation7], 14
    %v1894 = vld [vmem:[%s1893] sm:$0x1]
    %v1896 = vlaneseq
    %v1897 = vshrl.u32 %v1896, 7
    %v1898 = vsub.s32 0, %v1897
    %v1899 = vrot.slane %v1894, %v1898
    %v1917 = vunpack.c.l.b16 %v1877
    %v1918 = vunpack.c.l.b16 %v1878
    %v1919 = vunpack.c.l.b16 %v1879
    %v1920 = vunpack.c.l.b16 %v1880
    %v1921 = vunpack.c.l.b16 %v1881
    %v1922 = vunpack.c.l.b16 %v1882
    %v1923 = vunpack.c.l.b16 %v1883
    %v1924 = vunpack.c.l.b16 %v1884
    %v1925 = vunpack.c.l.b16 %v1885
    %v1926 = vunpack.c.l.b16 %v1886
    %v1927 = vunpack.c.l.b16 %v1887
    %v1928 = vunpack.c.l.b16 %v1888
    %v1929 = vunpack.c.l.b16 %v1889
    %v1930 = vunpack.c.l.b16 %v1890
    %v1931 = vunpack.c.l.b16 %v1891
    %v1932 = vunpack.c.l.b16 %v1892
    %v1933 = vpack.c.b16 %v1918, %v1917
    %v1934 = vpack.c.b16 %v1920, %v1919
    %v1935 = vpack.c.b16 %v1922, %v1921
    %v1936 = vpack.c.b16 %v1924, %v1923
    %v1937 = vpack.c.b16 %v1926, %v1925
    %v1938 = vpack.c.b16 %v1928, %v1927
    %v1939 = vpack.c.b16 %v1930, %v1929
    %v1940 = vpack.c.b16 %v1932, %v1931
    %1949 = vmatprep.subr.bf16.mxu0 0
    %1950 = vmatpush1.bf16.msra.mxu0 %v1933
    %1951 = vmatprep.subr.bf16.mxu0 0
    %1952 = vmatpush1.bf16.msra.mxu0 %v1934
    %1953 = vmatprep.subr.bf16.mxu0 0
    %1954 = vmatpush1.bf16.msra.mxu0 %v1935
    %1955 = vmatprep.subr.bf16.mxu0 0
    %1956 = vmatpush1.bf16.msra.mxu0 %v1936
    %1957 = vmatprep.subr.bf16.mxu0 0
    %1958 = vmatpush1.bf16.msra.mxu0 %v1937
    %1959 = vmatprep.subr.bf16.mxu0 0
    %1960 = vmatpush1.bf16.msra.mxu0 %v1938
    %1961 = vmatprep.subr.bf16.mxu0 0
    %1962 = vmatpush1.bf16.msra.mxu0 %v1939
    %1963 = vmatprep.subr.bf16.mxu0 0
    %1964 = vmatpush1.bf16.msra.mxu0 %v1940
    %1965 = vmatprep.subr.bf16.mxu0 0
    %1966 = vmatpush1.bf16.msra.mxu0 0
    %1967 = vmatprep.subr.bf16.mxu0 0
    %1968 = vmatpush1.bf16.msra.mxu0 0
    %1969 = vmatprep.subr.bf16.mxu0 0
    %1970 = vmatpush1.bf16.msra.mxu0 0
    %1971 = vmatprep.subr.bf16.mxu0 0
    %1972 = vmatpush1.bf16.msra.mxu0 0
    %1973 = vmatprep.subr.bf16.mxu0 0
    %1974 = vmatpush1.bf16.msra.mxu0 0
    %1975 = vmatprep.subr.bf16.mxu0 0
    %1976 = vmatpush1.bf16.msra.mxu0 0
    %1977 = vmatprep.subr.bf16.mxu0 0
    %1978 = vmatpush1.bf16.msra.mxu0 0
    %1979 = vmatprep.subr.bf16.mxu0 0
    %1980 = vmatpush1.bf16.msra.mxu0 0
    %1981 = vmatprep.mubr.bf16.mxu0 0
    %1982 = vmatmul.mubr.bf16.gmra.mrb[0].mxu0 %v1875
    %v1983 = vpop.f32.mrb[0].mxu0
    %v1984 = vadd.f32 %v1899, %v1983
    %v1985 = vpop.f32.mrb[0].mxu0
    %v1986 = vpop.f32.mrb[0].mxu0
    %v1987 = vadd.f32 %v1899, %v1986
    %v1988 = vpop.f32.mrb[0].mxu0
    %1989 = vdwg.mxu0
    %v1990 = vadd.f32 %v1984, %v1639
    %v1991 = vadd.f32 %v1987, %v1640
    %1992 = vadd.xlane.f32.xlu0 %v1990
    %v1993 = vpop.xlane.xlu0 %1992
    %1994 = vadd.xlane.f32.xlu0 %v1991
    %v1995 = vpop.xlane.xlu0 %1994
    %v1996 = vmul.f32 %v1993, %v425
    %v1997 = vmul.f32 %v1995, %v425
    %v1998 = vsub.f32 %v1990, %v1996
    %v1999 = vsub.f32 %v1991, %v1997
    %v2000 = vmul.f32 %v1998, %v1998
    %v2001 = vmul.f32 %v1999, %v1999
    %2002 = vadd.xlane.f32.xlu0 %v2000
    %v2003 = vpop.xlane.xlu0 %2002
    %2004 = vadd.xlane.f32.xlu0 %v2001
    %v2005 = vpop.xlane.xlu0 %2004
    %v2006 = vmul.f32 %v2003, %v425
    %v2007 = vmul.f32 %v2005, %v425
    %v2008 = vadd.f32 %v2006, 1e-05
    %v2009 = vadd.f32 %v2007, 1e-05
    %v2010 = vrsqrt.pop %v2008
    %v2011 = vrsqrt.pop %v2009
    %v2012 = vmul.f32 %v1998, %v2010
    %v2013 = vmul.f32 %v1999, %v2011
    %s2014 = scalar_lea.vmem %s3, 4
    %v2015 = vld [vmem:[%s2014] sm:$0x1]
    %v2017 = vlaneseq
    %v2018 = vshrl.u32 %v2017, 7
    %v2019 = vsub.s32 0, %v2018
    %v2020 = vrot.slane %v2015, %v2019
    %v2022 = vmul.f32 %v2012, %v2020
    %v2023 = vmul.f32 %v2013, %v2020
    %s2024 = scalar_lea.vmem %s4, 4
    %v2025 = vld [vmem:[%s2024] sm:$0x1]
    %v2027 = vlaneseq
    %v2028 = vshrl.u32 %v2027, 7
    %v2029 = vsub.s32 0, %v2028
    %v2030 = vrot.slane %v2025, %v2029
    %v2032 = vadd.f32 %v2022, %v2030
    %v2033 = vadd.f32 %v2023, %v2030
    %v2034 = vpack.c.bf16 %v2033, %v2032
    %s2035 = scalar_lea.vmem [#allocation5], 960
    %v2036 = vld [vmem:[%s2035] sm:$0xf]
    %v2037 = vld [vmem:[%s2035 + $0x4] sm:$0xf]
    %v2038 = vld [vmem:[%s2035 + $0x8] sm:$0xf]
    %v2039 = vld [vmem:[%s2035 + $0xc] sm:$0xf]
    %v2040 = vld [vmem:[%s2035 + $0x10] sm:$0xf]
    %v2041 = vld [vmem:[%s2035 + $0x14] sm:$0xf]
    %v2042 = vld [vmem:[%s2035 + $0x18] sm:$0xf]
    %v2043 = vld [vmem:[%s2035 + $0x1c] sm:$0xf]
    %v2044 = vld [vmem:[%s2035 + $0x20] sm:$0xf]
    %v2045 = vld [vmem:[%s2035 + $0x24] sm:$0xf]
    %v2046 = vld [vmem:[%s2035 + $0x28] sm:$0xf]
    %v2047 = vld [vmem:[%s2035 + $0x2c] sm:$0xf]
    %v2048 = vld [vmem:[%s2035 + $0x30] sm:$0xf]
    %v2049 = vld [vmem:[%s2035 + $0x34] sm:$0xf]
    %v2050 = vld [vmem:[%s2035 + $0x38] sm:$0xf]
    %v2051 = vld [vmem:[%s2035 + $0x3c] sm:$0xf]
    %s2052 = scalar_lea.vmem [#allocation7], 15
    %v2053 = vld [vmem:[%s2052] sm:$0x1]
    %v2055 = vlaneseq
    %v2056 = vshrl.u32 %v2055, 7
    %v2057 = vsub.s32 0, %v2056
    %v2058 = vrot.slane %v2053, %v2057
    %v2076 = vunpack.c.l.b16 %v2036
    %v2077 = vunpack.c.l.b16 %v2037
    %v2078 = vunpack.c.l.b16 %v2038
    %v2079 = vunpack.c.l.b16 %v2039
    %v2080 = vunpack.c.l.b16 %v2040
    %v2081 = vunpack.c.l.b16 %v2041
    %v2082 = vunpack.c.l.b16 %v2042
    %v2083 = vunpack.c.l.b16 %v2043
    %v2084 = vunpack.c.l.b16 %v2044
    %v2085 = vunpack.c.l.b16 %v2045
    %v2086 = vunpack.c.l.b16 %v2046
    %v2087 = vunpack.c.l.b16 %v2047
    %v2088 = vunpack.c.l.b16 %v2048
    %v2089 = vunpack.c.l.b16 %v2049
    %v2090 = vunpack.c.l.b16 %v2050
    %v2091 = vunpack.c.l.b16 %v2051
    %v2092 = vpack.c.b16 %v2077, %v2076
    %v2093 = vpack.c.b16 %v2079, %v2078
    %v2094 = vpack.c.b16 %v2081, %v2080
    %v2095 = vpack.c.b16 %v2083, %v2082
    %v2096 = vpack.c.b16 %v2085, %v2084
    %v2097 = vpack.c.b16 %v2087, %v2086
    %v2098 = vpack.c.b16 %v2089, %v2088
    %v2099 = vpack.c.b16 %v2091, %v2090
    %2108 = vmatprep.subr.bf16.mxu0 0
    %2109 = vmatpush1.bf16.msra.mxu0 %v2092
    %2110 = vmatprep.subr.bf16.mxu0 0
    %2111 = vmatpush1.bf16.msra.mxu0 %v2093
    %2112 = vmatprep.subr.bf16.mxu0 0
    %2113 = vmatpush1.bf16.msra.mxu0 %v2094
    %2114 = vmatprep.subr.bf16.mxu0 0
    %2115 = vmatpush1.bf16.msra.mxu0 %v2095
    %2116 = vmatprep.subr.bf16.mxu0 0
    %2117 = vmatpush1.bf16.msra.mxu0 %v2096
    %2118 = vmatprep.subr.bf16.mxu0 0
    %2119 = vmatpush1.bf16.msra.mxu0 %v2097
    %2120 = vmatprep.subr.bf16.mxu0 0
    %2121 = vmatpush1.bf16.msra.mxu0 %v2098
    %2122 = vmatprep.subr.bf16.mxu0 0
    %2123 = vmatpush1.bf16.msra.mxu0 %v2099
    %2124 = vmatprep.subr.bf16.mxu0 0
    %2125 = vmatpush1.bf16.msra.mxu0 0
    %2126 = vmatprep.subr.bf16.mxu0 0
    %2127 = vmatpush1.bf16.msra.mxu0 0
    %2128 = vmatprep.subr.bf16.mxu0 0
    %2129 = vmatpush1.bf16.msra.mxu0 0
    %2130 = vmatprep.subr.bf16.mxu0 0
    %2131 = vmatpush1.bf16.msra.mxu0 0
    %2132 = vmatprep.subr.bf16.mxu0 0
    %2133 = vmatpush1.bf16.msra.mxu0 0
    %2134 = vmatprep.subr.bf16.mxu0 0
    %2135 = vmatpush1.bf16.msra.mxu0 0
    %2136 = vmatprep.subr.bf16.mxu0 0
    %2137 = vmatpush1.bf16.msra.mxu0 0
    %2138 = vmatprep.subr.bf16.mxu0 0
    %2139 = vmatpush1.bf16.msra.mxu0 0
    %2140 = vmatprep.mubr.bf16.mxu0 0
    %2141 = vmatmul.mubr.bf16.gmra.mrb[0].mxu0 %v2034
    %v2142 = vpop.f32.mrb[0].mxu0
    %v2143 = vadd.f32 %v2058, %v2142
    %v2144 = vpop.f32.mrb[0].mxu0
    %v2145 = vpop.f32.mrb[0].mxu0
    %v2146 = vadd.f32 %v2058, %v2145
    %v2147 = vpop.f32.mrb[0].mxu0
    %2148 = vdwg.mxu0
    %v2149 = vmax.f32 %v2143, 0.0
    %v2150 = vmax.f32 %v2146, 0.0
    %v2151 = vpack.c.bf16 %v2150, %v2149
    %s2152 = scalar_lea.vmem [#allocation5], 1024
    %v2153 = vld [vmem:[%s2152] sm:$0xf]
    %v2154 = vld [vmem:[%s2152 + $0x4] sm:$0xf]
    %v2155 = vld [vmem:[%s2152 + $0x8] sm:$0xf]
    %v2156 = vld [vmem:[%s2152 + $0xc] sm:$0xf]
    %v2157 = vld [vmem:[%s2152 + $0x10] sm:$0xf]
    %v2158 = vld [vmem:[%s2152 + $0x14] sm:$0xf]
    %v2159 = vld [vmem:[%s2152 + $0x18] sm:$0xf]
    %v2160 = vld [vmem:[%s2152 + $0x1c] sm:$0xf]
    %v2161 = vld [vmem:[%s2152 + $0x20] sm:$0xf]
    %v2162 = vld [vmem:[%s2152 + $0x24] sm:$0xf]
    %v2163 = vld [vmem:[%s2152 + $0x28] sm:$0xf]
    %v2164 = vld [vmem:[%s2152 + $0x2c] sm:$0xf]
    %v2165 = vld [vmem:[%s2152 + $0x30] sm:$0xf]
    %v2166 = vld [vmem:[%s2152 + $0x34] sm:$0xf]
    %v2167 = vld [vmem:[%s2152 + $0x38] sm:$0xf]
    %v2168 = vld [vmem:[%s2152 + $0x3c] sm:$0xf]
    %s2169 = scalar_lea.vmem [#allocation7], 16
    %v2170 = vld [vmem:[%s2169] sm:$0x1]
    %v2172 = vlaneseq
    %v2173 = vshrl.u32 %v2172, 7
    %v2174 = vsub.s32 0, %v2173
    %v2175 = vrot.slane %v2170, %v2174
    %v2193 = vunpack.c.l.b16 %v2153
    %v2194 = vunpack.c.l.b16 %v2154
    %v2195 = vunpack.c.l.b16 %v2155
    %v2196 = vunpack.c.l.b16 %v2156
    %v2197 = vunpack.c.l.b16 %v2157
    %v2198 = vunpack.c.l.b16 %v2158
    %v2199 = vunpack.c.l.b16 %v2159
    %v2200 = vunpack.c.l.b16 %v2160
    %v2201 = vunpack.c.l.b16 %v2161
    %v2202 = vunpack.c.l.b16 %v2162
    %v2203 = vunpack.c.l.b16 %v2163
    %v2204 = vunpack.c.l.b16 %v2164
    %v2205 = vunpack.c.l.b16 %v2165
    %v2206 = vunpack.c.l.b16 %v2166
    %v2207 = vunpack.c.l.b16 %v2167
    %v2208 = vunpack.c.l.b16 %v2168
    %v2209 = vpack.c.b16 %v2194, %v2193
    %v2210 = vpack.c.b16 %v2196, %v2195
    %v2211 = vpack.c.b16 %v2198, %v2197
    %v2212 = vpack.c.b16 %v2200, %v2199
    %v2213 = vpack.c.b16 %v2202, %v2201
    %v2214 = vpack.c.b16 %v2204, %v2203
    %v2215 = vpack.c.b16 %v2206, %v2205
    %v2216 = vpack.c.b16 %v2208, %v2207
    %2225 = vmatprep.subr.bf16.mxu0 0
    %2226 = vmatpush1.bf16.msra.mxu0 %v2209
    %2227 = vmatprep.subr.bf16.mxu0 0
    %2228 = vmatpush1.bf16.msra.mxu0 %v2210
    %2229 = vmatprep.subr.bf16.mxu0 0
    %2230 = vmatpush1.bf16.msra.mxu0 %v2211
    %2231 = vmatprep.subr.bf16.mxu0 0
    %2232 = vmatpush1.bf16.msra.mxu0 %v2212
    %2233 = vmatprep.subr.bf16.mxu0 0
    %2234 = vmatpush1.bf16.msra.mxu0 %v2213
    %2235 = vmatprep.subr.bf16.mxu0 0
    %2236 = vmatpush1.bf16.msra.mxu0 %v2214
    %2237 = vmatprep.subr.bf16.mxu0 0
    %2238 = vmatpush1.bf16.msra.mxu0 %v2215
    %2239 = vmatprep.subr.bf16.mxu0 0
    %2240 = vmatpush1.bf16.msra.mxu0 %v2216
    %2241 = vmatprep.subr.bf16.mxu0 0
    %2242 = vmatpush1.bf16.msra.mxu0 0
    %2243 = vmatprep.subr.bf16.mxu0 0
    %2244 = vmatpush1.bf16.msra.mxu0 0
    %2245 = vmatprep.subr.bf16.mxu0 0
    %2246 = vmatpush1.bf16.msra.mxu0 0
    %2247 = vmatprep.subr.bf16.mxu0 0
    %2248 = vmatpush1.bf16.msra.mxu0 0
    %2249 = vmatprep.subr.bf16.mxu0 0
    %2250 = vmatpush1.bf16.msra.mxu0 0
    %2251 = vmatprep.subr.bf16.mxu0 0
    %2252 = vmatpush1.bf16.msra.mxu0 0
    %2253 = vmatprep.subr.bf16.mxu0 0
    %2254 = vmatpush1.bf16.msra.mxu0 0
    %2255 = vmatprep.subr.bf16.mxu0 0
    %2256 = vmatpush1.bf16.msra.mxu0 0
    %2257 = vmatprep.mubr.bf16.mxu0 0
    %2258 = vmatmul.mubr.bf16.gmra.mrb[0].mxu0 %v2151
    %v2259 = vpop.f32.mrb[0].mxu0
    %v2260 = vadd.f32 %v2175, %v2259
    %v2261 = vpop.f32.mrb[0].mxu0
    %v2262 = vpop.f32.mrb[0].mxu0
    %v2263 = vadd.f32 %v2175, %v2262
    %v2264 = vpop.f32.mrb[0].mxu0
    %2265 = vdwg.mxu0
    %v2266 = vmax.f32 %v2260, 0.0
    %v2267 = vmax.f32 %v2263, 0.0
    %v2268 = vpack.c.bf16 %v2267, %v2266
    %s2269 = scalar_lea.vmem [#allocation5], 1088
    %v2270 = vld [vmem:[%s2269] sm:$0xf]
    %v2271 = vld [vmem:[%s2269 + $0x4] sm:$0xf]
    %v2272 = vld [vmem:[%s2269 + $0x8] sm:$0xf]
    %v2273 = vld [vmem:[%s2269 + $0xc] sm:$0xf]
    %v2274 = vld [vmem:[%s2269 + $0x10] sm:$0xf]
    %v2275 = vld [vmem:[%s2269 + $0x14] sm:$0xf]
    %v2276 = vld [vmem:[%s2269 + $0x18] sm:$0xf]
    %v2277 = vld [vmem:[%s2269 + $0x1c] sm:$0xf]
    %v2278 = vld [vmem:[%s2269 + $0x20] sm:$0xf]
    %v2279 = vld [vmem:[%s2269 + $0x24] sm:$0xf]
    %v2280 = vld [vmem:[%s2269 + $0x28] sm:$0xf]
    %v2281 = vld [vmem:[%s2269 + $0x2c] sm:$0xf]
    %v2282 = vld [vmem:[%s2269 + $0x30] sm:$0xf]
    %v2283 = vld [vmem:[%s2269 + $0x34] sm:$0xf]
    %v2284 = vld [vmem:[%s2269 + $0x38] sm:$0xf]
    %v2285 = vld [vmem:[%s2269 + $0x3c] sm:$0xf]
    %s2286 = scalar_lea.vmem [#allocation7], 17
    %v2287 = vld [vmem:[%s2286] sm:$0x1]
    %v2289 = vlaneseq
    %v2290 = vshrl.u32 %v2289, 7
    %v2291 = vsub.s32 0, %v2290
    %v2292 = vrot.slane %v2287, %v2291
    %v2310 = vunpack.c.l.b16 %v2270
    %v2311 = vunpack.c.l.b16 %v2271
    %v2312 = vunpack.c.l.b16 %v2272
    %v2313 = vunpack.c.l.b16 %v2273
    %v2314 = vunpack.c.l.b16 %v2274
    %v2315 = vunpack.c.l.b16 %v2275
    %v2316 = vunpack.c.l.b16 %v2276
    %v2317 = vunpack.c.l.b16 %v2277
    %v2318 = vunpack.c.l.b16 %v2278
    %v2319 = vunpack.c.l.b16 %v2279
    %v2320 = vunpack.c.l.b16 %v2280
    %v2321 = vunpack.c.l.b16 %v2281
    %v2322 = vunpack.c.l.b16 %v2282
    %v2323 = vunpack.c.l.b16 %v2283
    %v2324 = vunpack.c.l.b16 %v2284
    %v2325 = vunpack.c.l.b16 %v2285
    %v2326 = vpack.c.b16 %v2311, %v2310
    %v2327 = vpack.c.b16 %v2313, %v2312
    %v2328 = vpack.c.b16 %v2315, %v2314
    %v2329 = vpack.c.b16 %v2317, %v2316
    %v2330 = vpack.c.b16 %v2319, %v2318
    %v2331 = vpack.c.b16 %v2321, %v2320
    %v2332 = vpack.c.b16 %v2323, %v2322
    %v2333 = vpack.c.b16 %v2325, %v2324
    %2342 = vmatprep.subr.bf16.mxu0 0
    %2343 = vmatpush1.bf16.msra.mxu0 %v2326
    %2344 = vmatprep.subr.bf16.mxu0 0
    %2345 = vmatpush1.bf16.msra.mxu0 %v2327
    %2346 = vmatprep.subr.bf16.mxu0 0
    %2347 = vmatpush1.bf16.msra.mxu0 %v2328
    %2348 = vmatprep.subr.bf16.mxu0 0
    %2349 = vmatpush1.bf16.msra.mxu0 %v2329
    %2350 = vmatprep.subr.bf16.mxu0 0
    %2351 = vmatpush1.bf16.msra.mxu0 %v2330
    %2352 = vmatprep.subr.bf16.mxu0 0
    %2353 = vmatpush1.bf16.msra.mxu0 %v2331
    %2354 = vmatprep.subr.bf16.mxu0 0
    %2355 = vmatpush1.bf16.msra.mxu0 %v2332
    %2356 = vmatprep.subr.bf16.mxu0 0
    %2357 = vmatpush1.bf16.msra.mxu0 %v2333
    %2358 = vmatprep.subr.bf16.mxu0 0
    %2359 = vmatpush1.bf16.msra.mxu0 0
    %2360 = vmatprep.subr.bf16.mxu0 0
    %2361 = vmatpush1.bf16.msra.mxu0 0
    %2362 = vmatprep.subr.bf16.mxu0 0
    %2363 = vmatpush1.bf16.msra.mxu0 0
    %2364 = vmatprep.subr.bf16.mxu0 0
    %2365 = vmatpush1.bf16.msra.mxu0 0
    %2366 = vmatprep.subr.bf16.mxu0 0
    %2367 = vmatpush1.bf16.msra.mxu0 0
    %2368 = vmatprep.subr.bf16.mxu0 0
    %2369 = vmatpush1.bf16.msra.mxu0 0
    %2370 = vmatprep.subr.bf16.mxu0 0
    %2371 = vmatpush1.bf16.msra.mxu0 0
    %2372 = vmatprep.subr.bf16.mxu0 0
    %2373 = vmatpush1.bf16.msra.mxu0 0
    %2374 = vmatprep.mubr.bf16.mxu0 0
    %2375 = vmatmul.mubr.bf16.gmra.mrb[0].mxu0 %v2268
    %v2376 = vpop.f32.mrb[0].mxu0
    %v2377 = vadd.f32 %v2292, %v2376
    %v2378 = vpop.f32.mrb[0].mxu0
    %v2379 = vpop.f32.mrb[0].mxu0
    %v2380 = vadd.f32 %v2292, %v2379
    %v2381 = vpop.f32.mrb[0].mxu0
    %2382 = vdwg.mxu0
    %v2383 = vadd.f32 %v2377, %v2032
    %v2384 = vadd.f32 %v2380, %v2033
    %2385 = vst [vmem:[#allocation8] sm:$0xff] %v2383
    %2386 = vst [vmem:[#allocation8 + $0x8] sm:$0xff] %v2384
    // Predicated region
    $region34: #{tpu_custom_call.1} parent=1 // pred_check
      _
    $region35: #{tpu_custom_call.1} parent=1 // pred_check_branch
      %2388 = sbr.rel (0) target = $region37
    $region36: #{tpu_custom_call.1} parent=1 // pred_region
      %s2390 = ssub.s32 256, 256
      %2391 = vsyncadd [#allocation4], %s2390
      %s2392 = sshll.u32 [#allocation8], 4
      %s2393 = int_to_ptr.vmem [resolvable:$true] %s2392
      %2398 = dma.vmem_to_hbm [thread:$0]  %s2393, 256, %s5, [#allocation4], 128, 128, 8
    $region37: #{tpu_custom_call.1} parent=1 // pred_fallthru
      _
    // Predicated region
    $region38: #{tpu_custom_call.1} parent=1 // pred_check
      _
    $region39: #{tpu_custom_call.1} parent=1 // pred_check_branch
      %2400 = sbr.rel (0) target = $region41
    $region40: #{tpu_custom_call.1} parent=1 // pred_region
      %2401 = dma.done [#allocation4], 256
    $region41: #{tpu_custom_call.1} parent=1 // pred_fallthru
      _
    %2402 = vsyncpa [#allocation3], 1
    %2403 = vsyncpa [#allocation6], 1
    %2404 = vsyncpa [#allocation4], 1

</llo_original>
